<compile_context>
chip_gen: v7x
topology: tpu7x:2x2x1
jax: 0.10.0
libtpu: 0.0.40
codegen_flags: <defaults>
</compile_context>

<pallas_src>
import functools

import numpy as np
import jax
import jax.numpy as jnp
from jax.experimental import pallas as pl
from jax.experimental.pallas import tpu as pltpu


# ---------------------------------------------------------------------------
# Parameter / spliner-table construction (plain numpy glue, deterministic)
# ---------------------------------------------------------------------------
def get_basis_size(max_radial, max_angular, trim=False):
    # trim=False branch of TrimmedAndSplined.get_basis_size
    assert not trim  # TODO(synk): trimming requires compute_eigenvalues impl
    return [max_radial + 1] * (max_angular + 1)


def _trapezoid(y, x):
    # numpy-version-proof trapezoid rule (np.trapz removed in numpy 2.x)
    return float(np.sum(0.5 * (y[1:] + y[:-1]) * np.diff(x)))


def make_spliner_tables(cutoff, n_per_l, n_points, normalize=True):
    """Build spline_values / spline_derivatives tables [n_points, n_basis]."""
    xs = np.linspace(0.0, cutoff, n_points)
    fine = np.linspace(0.0, cutoff, 8192)
    cols_v, cols_d = [], []
    for l, number_of_n in enumerate(n_per_l):
        for n in range(number_of_n):
            w = (n + 1) * np.pi / cutoff
            poly = (xs / cutoff) ** l
            if l > 0:
                dpoly = l * xs ** (l - 1) / cutoff ** l
            else:
                dpoly = np.zeros_like(xs)
            f = np.sin(w * xs) * poly
            df = w * np.cos(w * xs) * poly + np.sin(w * xs) * dpoly
            if normalize:
                ff = np.sin(w * fine) * (fine / cutoff) ** l
                norm = np.sqrt(_trapezoid(ff * ff, fine))
                f = f / norm
                df = df / norm
            cols_v.append(f)
            cols_d.append(df)
    values = np.stack(cols_v, axis=1).astype(np.float32)
    derivs = np.stack(cols_d, axis=1).astype(np.float32)
    return values, derivs


def make_fused_table(spline_values, spline_derivatives, cutoff):
    """Fuse [values ; dx*derivatives] and transpose -> (n_basis, 2*n_points)."""
    n_points = spline_values.shape[0]
    dx = float(cutoff) / float(n_points - 1)
    fused = np.concatenate(
        [spline_values, dx * spline_derivatives], axis=0)       # (2N, n_basis)
    return np.ascontiguousarray(fused.T.astype(np.float32))     # (n_basis, 2N)


# ---------------------------------------------------------------------------
# Pallas kernel: cubic Hermite spline evaluation of all basis functions
# ---------------------------------------------------------------------------
def _spline_kernel(r_ref, table_ref, out_ref, *, delta_x, n_points):
    # r_ref:     (1, TP)               distances, pairs on lanes
    # table_ref: (n_basis, 2*n_points) fused [V ; dx*D] table, transposed
    # out_ref:   (n_basis, TP)         basis values, lane-dense stores
    r = r_ref[...]                                   # (1, TP) f32
    x = r / delta_x
    k_f = jnp.clip(jnp.floor(x), 0.0, float(n_points - 2))
    t = x - k_f                                      # (1, TP)
    t2 = t * t
    t3 = t2 * t
    h00 = 2.0 * t3 - 3.0 * t2 + 1.0
    h10 = t3 - 2.0 * t2 + t
    h01 = -2.0 * t3 + 3.0 * t2
    h11 = t3 - t2
    k = k_f.astype(jnp.int32)                        # (1, TP)

    # Fused selection/weight matrix, row j selects (conditions are exclusive):
    #   j == k              -> h00   (value at grid point k)
    #   j == k+1            -> h01   (value at grid point k+1)
    #   j == n_points+k     -> h10   (dx-scaled derivative at k)
    #   j == n_points+k+1   -> h11   (dx-scaled derivative at k+1)
    iota = jax.lax.broadcasted_iota(jnp.int32, (2 * n_points, 1), 0)
    w = jnp.where(iota == k, h00,
        jnp.where(iota == k + 1, h01,
        jnp.where(iota == k + n_points, h10,
        jnp.where(iota == k + n_points + 1, h11, 0.0))))   # (2*n_points, TP)

    out_ref[...] = jnp.dot(table_ref[...], w,
                           preferred_element_type=jnp.float32,
                           precision=jax.lax.Precision.HIGHEST)


def trimmed_and_splined_forward(r, fused_table, cutoff, n_points, n_per_l, *,
                                tile_pairs=256):
    """Forward pass: r [pair] -> list of [pair, n_per_l[l]] arrays.

    tile_pairs is a tunable; sweep 256-1024 for large pair counts.  It is
    auto-shrunk for small inputs so padding stays small and the parallel grid
    keeps >= 2 steps (v7x megacore sharding).
    """
    n_basis = fused_table.shape[0]
    assert fused_table.shape[1] == 2 * n_points
    delta_x = float(cutoff) / float(n_points - 1)

    p = r.shape[0]
    tile = int(tile_pairs)
    while tile > 128 and p <= tile:
        tile //= 2
    p_pad = pl.cdiv(p, tile) * tile

    # Lane-dense row of distances (pairs on lanes); padded tail is r=0,
    # results there are valid but discarded.
    r_row = jnp.zeros((1, p_pad), jnp.float32).at[0, :p].set(
        r.astype(jnp.float32))

    kernel = functools.partial(_spline_kernel, delta_x=delta_x,
                               n_points=int(n_points))
    basis_t = pl.pallas_call(
        kernel,
        out_shape=jax.ShapeDtypeStruct((n_basis, p_pad), jnp.float32),
        grid_spec=pltpu.PrefetchScalarGridSpec(
            num_scalar_prefetch=0,
            grid=(p_pad // tile,),
            in_specs=[
                pl.BlockSpec((1, tile), lambda i: (0, i)),
                pl.BlockSpec((n_basis, 2 * n_points), lambda i: (0, 0)),
            ],
            out_specs=pl.BlockSpec((n_basis, tile), lambda i: (0, i)),
        ),
        compiler_params=pltpu.CompilerParams(
            dimension_semantics=("parallel",)),
    )(r_row, fused_table)

    basis = basis_t[:, :p].T                       # back to [pair, n_basis]
    # split into per-degree list (matches torch Tensor.split(n_per_l, dim=-1))
    per_degree = []
    start = 0
    for n in n_per_l:
        per_degree.append(basis[:, start:start + n])
        start += n
    return per_degree


# ---------------------------------------------------------------------------
# Pure-JAX reference (for correctness check)
# ---------------------------------------------------------------------------
def reference_forward(r, vals, derivs, cutoff, n_per_l):
    n_points = vals.shape[0]
    dx = float(cutoff) / float(n_points - 1)
    x = r / dx
    k = jnp.clip(jnp.floor(x), 0, n_points - 2).astype(jnp.int32)
    t = x - k.astype(jnp.float32)
    t2, t3 = t * t, t * t * t
    h00 = 2 * t3 - 3 * t2 + 1
    h10 = t3 - 2 * t2 + t
    h01 = -2 * t3 + 3 * t2
    h11 = t3 - t2
    pk, pk1 = vals[k], vals[k + 1]
    mk, mk1 = derivs[k], derivs[k + 1]
    out = (h00[:, None] * pk + h10[:, None] * dx * mk
           + h01[:, None] * pk1 + h11[:, None] * dx * mk1)
    per_degree, start = [], 0
    for n in n_per_l:
        per_degree.append(out[:, start:start + n])
        start += n
    return per_degree


if __name__ == "__main__":
    cutoff = 5.0
    max_radial = 7
    max_angular = 3
    n_points = 256          # spline grid resolution (multiple of 256: one/two
                            # full MXU contraction passes for the fused table)
    n_per_l = get_basis_size(max_radial, max_angular, trim=False)  # [8,8,8,8]

    spline_values_np, spline_derivs_np = make_spliner_tables(
        cutoff, n_per_l, n_points, normalize=True)
    fused_table = jnp.asarray(
        make_fused_table(spline_values_np, spline_derivs_np, cutoff))

    key = jax.random.PRNGKey(0)
    n_pairs = 200
    r = jax.random.uniform(key, (n_pairs,), dtype=jnp.float32,
                           minval=0.0, maxval=0.999 * cutoff)

    out = trimmed_and_splined_forward(r, fused_table, cutoff, n_points,
                                      n_per_l, tile_pairs=256)
    out = [jax.block_until_ready(o) for o in out]

    ref = reference_forward(r, jnp.asarray(spline_values_np),
                            jnp.asarray(spline_derivs_np), cutoff, n_per_l)
    for o, rf, n in zip(out, ref, n_per_l):
        assert o.shape == (n_pairs, n), o.shape
        np.testing.assert_allclose(np.asarray(o), np.asarray(rf),
                                   rtol=1e-5, atol=1e-5)

    print("KERNEL_OK")
</pallas_src>

<mosaic_0001>
module attributes {stable_mosaic.version = 11 : i64} {
  func.func @_spline_kernel(%arg0: i32, %arg1: memref<1x128xf32, #tpu.memory_space<vmem>>, %arg2: memref<32x512xf32, #tpu.memory_space<vmem>>, %arg3: memref<32x128xf32, #tpu.memory_space<vmem>>) attributes {dimension_semantics = [#tpu.dimension_semantics<parallel>], iteration_bounds = array<i64: 2>, scalar_prefetch = 0 : i64, scratch_operands = 0 : i64, tpu.core_type = #tpu.core_type<tc>, window_params = [{transform_indices = @transform_0, window_bounds = array<i64: 1, 128>}, {pipeline_mode = #tpu.pipeline_mode<synchronous>, transform_indices = @transform_1, window_bounds = array<i64: 32, 512>}, {transform_indices = @transform_2, window_bounds = array<i64: 32, 128>}]} {
    %c0 = arith.constant 0 : index
    %c0_0 = arith.constant 0 : index
    %0 = vector.load %arg1[%c0, %c0_0] : memref<1x128xf32, #tpu.memory_space<vmem>>, vector<1x128xf32>
    %cst = arith.constant 0.0196078438 : f32
    %1 = vector.broadcast %cst : f32 to vector<1x128xf32>
    %2 = arith.divf %0, %1 : vector<1x128xf32>
    %3 = math.floor %2 : vector<1x128xf32>
    %cst_1 = arith.constant 0.000000e+00 : f32
    %cst_2 = arith.constant 2.540000e+02 : f32
    %4 = vector.broadcast %cst_1 : f32 to vector<1x128xf32>
    %5 = arith.maximumf %4, %3 : vector<1x128xf32>
    %6 = vector.broadcast %cst_2 : f32 to vector<1x128xf32>
    %7 = arith.minimumf %6, %5 : vector<1x128xf32>
    %8 = arith.subf %2, %7 : vector<1x128xf32>
    %9 = arith.mulf %8, %8 : vector<1x128xf32>
    %10 = arith.mulf %9, %8 : vector<1x128xf32>
    %cst_3 = arith.constant 2.000000e+00 : f32
    %11 = vector.broadcast %cst_3 : f32 to vector<1x128xf32>
    %12 = arith.mulf %11, %10 : vector<1x128xf32>
    %cst_4 = arith.constant 3.000000e+00 : f32
    %13 = vector.broadcast %cst_4 : f32 to vector<1x128xf32>
    %14 = arith.mulf %13, %9 : vector<1x128xf32>
    %15 = arith.subf %12, %14 : vector<1x128xf32>
    %cst_5 = arith.constant 1.000000e+00 : f32
    %16 = vector.broadcast %cst_5 : f32 to vector<1x128xf32>
    %17 = arith.addf %15, %16 : vector<1x128xf32>
    %cst_6 = arith.constant 2.000000e+00 : f32
    %18 = vector.broadcast %cst_6 : f32 to vector<1x128xf32>
    %19 = arith.mulf %18, %9 : vector<1x128xf32>
    %20 = arith.subf %10, %19 : vector<1x128xf32>
    %21 = arith.addf %20, %8 : vector<1x128xf32>
    %cst_7 = arith.constant -2.000000e+00 : f32
    %22 = vector.broadcast %cst_7 : f32 to vector<1x128xf32>
    %23 = arith.mulf %22, %10 : vector<1x128xf32>
    %cst_8 = arith.constant 3.000000e+00 : f32
    %24 = vector.broadcast %cst_8 : f32 to vector<1x128xf32>
    %25 = arith.mulf %24, %9 : vector<1x128xf32>
    %26 = arith.addf %23, %25 : vector<1x128xf32>
    %27 = arith.subf %10, %9 : vector<1x128xf32>
    %28 = arith.fptosi %7 : vector<1x128xf32> to vector<1x128xi32>
    %29 = tpu.iota {dimensions = array<i32: 0>} : vector<512x1xi32>
    %30 = vector.broadcast %29 : vector<512x1xi32> to vector<512x128xi32>
    %31 = vector.broadcast %28 : vector<1x128xi32> to vector<512x128xi32>
    %32 = arith.cmpi eq, %30, %31 : vector<512x128xi32>
    %c1_i32 = arith.constant 1 : i32
    %33 = vector.broadcast %c1_i32 : i32 to vector<1x128xi32>
    %34 = arith.addi %28, %33 : vector<1x128xi32>
    %35 = vector.broadcast %29 : vector<512x1xi32> to vector<512x128xi32>
    %36 = vector.broadcast %34 : vector<1x128xi32> to vector<512x128xi32>
    %37 = arith.cmpi eq, %35, %36 : vector<512x128xi32>
    %c256_i32 = arith.constant 256 : i32
    %38 = vector.broadcast %c256_i32 : i32 to vector<1x128xi32>
    %39 = arith.addi %28, %38 : vector<1x128xi32>
    %40 = vector.broadcast %29 : vector<512x1xi32> to vector<512x128xi32>
    %41 = vector.broadcast %39 : vector<1x128xi32> to vector<512x128xi32>
    %42 = arith.cmpi eq, %40, %41 : vector<512x128xi32>
    %c256_i32_9 = arith.constant 256 : i32
    %43 = vector.broadcast %c256_i32_9 : i32 to vector<1x128xi32>
    %44 = arith.addi %28, %43 : vector<1x128xi32>
    %c1_i32_10 = arith.constant 1 : i32
    %45 = vector.broadcast %c1_i32_10 : i32 to vector<1x128xi32>
    %46 = arith.addi %44, %45 : vector<1x128xi32>
    %47 = vector.broadcast %29 : vector<512x1xi32> to vector<512x128xi32>
    %48 = vector.broadcast %46 : vector<1x128xi32> to vector<512x128xi32>
    %49 = arith.cmpi eq, %47, %48 : vector<512x128xi32>
    %cst_11 = arith.constant 0.000000e+00 : f32
    %50 = vector.shape_cast %27 : vector<1x128xf32> to vector<1x128xf32>
    %51 = vector.broadcast %50 : vector<1x128xf32> to vector<512x128xf32>
    %52 = vector.broadcast %cst_11 : f32 to vector<512x128xf32>
    %53 = arith.select %49, %51, %52 : vector<512x128xi1>, vector<512x128xf32>
    %54 = vector.shape_cast %21 : vector<1x128xf32> to vector<1x128xf32>
    %55 = vector.broadcast %54 : vector<1x128xf32> to vector<512x128xf32>
    %56 = arith.select %42, %55, %53 : vector<512x128xi1>, vector<512x128xf32>
    %57 = vector.shape_cast %26 : vector<1x128xf32> to vector<1x128xf32>
    %58 = vector.broadcast %57 : vector<1x128xf32> to vector<512x128xf32>
    %59 = arith.select %37, %58, %56 : vector<512x128xi1>, vector<512x128xf32>
    %60 = vector.shape_cast %17 : vector<1x128xf32> to vector<1x128xf32>
    %61 = vector.broadcast %60 : vector<1x128xf32> to vector<512x128xf32>
    %62 = arith.select %32, %61, %59 : vector<512x128xi1>, vector<512x128xf32>
    %c0_12 = arith.constant 0 : index
    %c0_13 = arith.constant 0 : index
    %63 = vector.load %arg2[%c0_12, %c0_13] : memref<32x512xf32, #tpu.memory_space<vmem>>, vector<32x512xf32>
    %cst_14 = arith.constant dense<0.000000e+00> : vector<32x128xf32>
    %64 = tpu.matmul %63, %62, %cst_14 {dimension_numbers = #tpu.dot_dimension_numbers<[1], [0], [0], [1], [0, 0, 1, 1], [], []>, precision = #tpu.contract_precision<fp32>} : vector<32x512xf32>, vector<512x128xf32>, vector<32x128xf32> -> vector<32x128xf32>
    %c0_15 = arith.constant 0 : index
    %c0_16 = arith.constant 0 : index
    %65 = vector.load %arg3[%c0_15, %c0_16] : memref<32x128xf32, #tpu.memory_space<vmem>>, vector<32x128xf32>
    tpu.vector_store %arg3[%c0_15, %c0_16], %64 {strides = array<i32>} : memref<32x128xf32, #tpu.memory_space<vmem>>, vector<32x128xf32>,
    return
  }
  func.func @transform_0(%arg0: i32) -> (i32, i32) {
    %c0_i32 = arith.constant 0 : i32
    %c0_i32_0 = arith.constant 0 : i32
    return %c0_i32, %arg0 : i32, i32
  }
  func.func @transform_1(%arg0: i32) -> (i32, i32) {
    %c0_i32 = arith.constant 0 : i32
    %c0_i32_0 = arith.constant 0 : i32
    %c0_i32_1 = arith.constant 0 : i32
    return %c0_i32, %c0_i32_0 : i32, i32
  }
  func.func @transform_2(%arg0: i32) -> (i32, i32) {
    %c0_i32 = arith.constant 0 : i32
    %c0_i32_0 = arith.constant 0 : i32
    return %c0_i32, %arg0 : i32, i32
  }
}

</mosaic_0001>

<llo_original>
// kernel: tpu_custom_call.1
$region0: #{tpu_custom_call.1}
  #allocation0 [shape = 'u32[]', space=smem, size = 0x4, offset = 0x4, fixed_abs, tag = 'smem constant byte address 0x4 - core index']
  #allocation1 [shape = 'u32[144,128]{1,0:T(1,128)}', space=vmem, size = 0x12000, scoped, tag = 'internal scratch']
  %s0 = inlined_call_operand.hbm [shape: f32[1,256], index: 0, kind: input, shape index: {}]
  %s1 = inlined_call_operand.hbm [shape: f32[32,512], index: 1, kind: input, shape index: {}]
  %s2 = inlined_call_operand.hbm [shape: f32[32,256], index: 2, kind: output, shape index: {}]
  %s3 = sld [smem:[#allocation0]]
  $region49: #{tpu_custom_call.1} parent=0
    _
  %s5 = ssub.s32 1, %s3
  %s6 = scalar_select 0, %s5, %s3
  $region1: #{tpu_custom_call.1} parent=0
    #allocation2 [shape = 'u8[1024]{0}', space=vmem, size = 0x400, scoped, tag = 'input window, operand 0']
    #allocation3 [shape = 's32[2]{0}', space=sflag, size = 0x8, scoped, tag = 'scoped memory for tpu_custom_call.1']
    #allocation4 [shape = 's32[2]{0}', space=sflag, size = 0x8, scoped, tag = 'scoped memory for tpu_custom_call.1']
    #allocation5 [shape = 'u8[65536]{0}', space=vmem, size = 0x10000, scoped, tag = 'input window, operand 1, single buffered']
    #allocation6 [shape = 's32[1]{0}', space=sflag, size = 0x4, scoped, tag = 'scoped memory for tpu_custom_call.1']
    #allocation7 [shape = 'u8[32768]{0}', space=vmem, size = 0x8000, scoped, tag = 'output window, operand 0']
    %7 = vsyncpa [#allocation3], 0
    %s8 = scalar_lea.sflag [#allocation3], 1
    %9 = vsyncpa %s8, 0
    %10 = vsyncpa [#allocation6], 0
    %11 = vsyncpa [#allocation4], 0
    %s12 = scalar_lea.sflag [#allocation4], 1
    %13 = vsyncpa %s12, 0
    loop: start=0, step=1, limit=4
    $region2: #{tpu_custom_call.1} parent=1 // loop_pre_header
      _
    $region3: #{tpu_custom_call.1} parent=1 // loop_header
      %s15 = sphi 0, %s19
      %p16 = scmp.ge.s32.totalorder %s15, 4
      %s25 = sphi 0, %s27
      %s28 = sphi 0, %s25
      %s29 = sphi 0, %s28
      %s45 = sphi 0, %s29
      %s49 = sphi 0, %s49
      %s51 = sphi 0, %s49
      %s52 = sphi 0, %s51
      %s66 = sphi 0, %s52
      %s72 = sphi 0, %s74
      %s75 = sphi 0, %s72
      %s76 = sphi 0, %s75
      %s92 = sphi 0, %s76
    $region4: #{tpu_custom_call.1} parent=1 // loop_header_branch
      %18 = sbr.rel (%p16) target = $region8
    $region5: #{tpu_custom_call.1} parent=1 // loop_body
      %s20 = ssub.s32 %s15, 1
      %s21 = ssub.s32 %s15, 2
      %s22 = sadd.s32 %s15, 1
      %s23 = ssub.s32 %s15, %s22
      %p24 = scmp.eq.s32.totalorder %s23, 0
      %s26 = sadd.s32 %s25, 1
      %s27 = scalar_select %p24, %s25, %s26
      %p30 = pneg %p24
      %p31 = scmp.eq.s32.totalorder %s15, 1
      %p32 = por %p30, %p31
      %p33 = scmp.ne.s32.totalorder %s25, %s28
      %p34 = scmp.eq.s32.totalorder %s15, 0
      %p35 = por %p33, %p34
      %p36 = scmp.ne.s32.totalorder %s25, %s28
      %p37 = scmp.eq.s32.totalorder %s20, 1
      %p38 = por %p36, %p37
      %p39 = scmp.ne.s32.totalorder %s28, %s29
      %p40 = scmp.eq.s32.totalorder %s20, 0
      %p41 = por %p39, %p40
      %p42 = scmp.ne.s32.totalorder %s28, %s29
      %p43 = scmp.eq.s32.totalorder %s21, 1
      %p44 = por %p42, %p43
      %p46 = scmp.ne.s32.totalorder %s29, %s45
      %p47 = scmp.eq.s32.totalorder %s21, 0
      %p48 = por %p46, %p47
      %s50 = sadd.s32 %s49, 1
      %p53 = scmp.eq.s32.totalorder %s15, 1
      %p54 = scmp.ne.s32.totalorder %s49, %s51
      %p55 = scmp.eq.s32.totalorder %s15, 0
      %p56 = por %p54, %p55
      %p57 = scmp.ne.s32.totalorder %s49, %s51
      %p58 = scmp.eq.s32.totalorder %s20, 1
      %p59 = por %p57, %p58
      %p60 = scmp.ne.s32.totalorder %s51, %s52
      %p61 = scmp.eq.s32.totalorder %s20, 0
      %p62 = por %p60, %p61
      %p63 = scmp.ne.s32.totalorder %s51, %s52
      %p64 = scmp.eq.s32.totalorder %s21, 1
      %p65 = por %p63, %p64
      %p67 = scmp.ne.s32.totalorder %s52, %s66
      %p68 = scmp.eq.s32.totalorder %s21, 0
      %p69 = por %p67, %p68
      %s70 = ssub.s32 %s15, %s22
      %p71 = scmp.eq.s32.totalorder %s70, 0
      %s73 = sadd.s32 %s72, 1
      %s74 = scalar_select %p71, %s72, %s73
      %p77 = pneg %p71
      %p78 = scmp.eq.s32.totalorder %s15, 1
      %p79 = por %p77, %p78
      %p80 = scmp.ne.s32.totalorder %s72, %s75
      %p81 = scmp.eq.s32.totalorder %s15, 0
      %p82 = por %p80, %p81
      %p83 = scmp.ne.s32.totalorder %s72, %s75
      %p84 = scmp.eq.s32.totalorder %s20, 1
      %p85 = por %p83, %p84
      %p86 = scmp.ne.s32.totalorder %s75, %s76
      %p87 = scmp.eq.s32.totalorder %s20, 0
      %p88 = por %p86, %p87
      %p89 = scmp.ne.s32.totalorder %s75, %s76
      %p90 = scmp.eq.s32.totalorder %s21, 1
      %p91 = por %p89, %p90
      %p93 = scmp.ne.s32.totalorder %s76, %s92
      %p94 = scmp.eq.s32.totalorder %s21, 0
      %p95 = por %p93, %p94
      %p96 = scmp.le.s32.totalorder 1, %s15
      %p97 = scmp.lt.s32.totalorder %s15, 3
      %p98 = pnand %p96, %p97
      %p99 = pneg %p98
      // Predicated region
      $region9: #{tpu_custom_call.1} parent=5 // pred_check
        _
      $region10: #{tpu_custom_call.1} parent=5 // pred_check_branch
        %101 = sbr.rel (%p98) target = $region12
      $region11: #{tpu_custom_call.1} parent=5 // pred_region
        %s102 = ssub.s32 %s15, 1
        // Predicated region
        $region13: #{tpu_custom_call.1} parent=11 // pred_check
          %p103 = pneg %p62
        $region14: #{tpu_custom_call.1} parent=11 // pred_check_branch
          %105 = sbr.rel (%p103) target = $region16
        $region15: #{tpu_custom_call.1} parent=11 // pred_region
          %s107 = ssub.s32 2048, 2048
          %108 = vsyncadd [#allocation6], %s107
          %s109 = sshll.u32 [#allocation5], 4
          %s110 = int_to_ptr.vmem [resolvable:$true] %s109
          %115 = dma.hbm_to_vmem [thread:$0]  %s1, 2048, %s110, [#allocation6], 512, 512, 32
        $region16: #{tpu_custom_call.1} parent=11 // pred_fallthru
          _
      $region12: #{tpu_custom_call.1} parent=5 // pred_fallthru
        _
      %p116 = scmp.lt.s32.totalorder %s15, 2
      // Predicated region
      $region17: #{tpu_custom_call.1} parent=5 // pred_check
        %p117 = pneg %p116
      $region18: #{tpu_custom_call.1} parent=5 // pred_check_branch
        %119 = sbr.rel (%p117) target = $region20
      $region19: #{tpu_custom_call.1} parent=5 // pred_region
        // Predicated region
        $region21: #{tpu_custom_call.1} parent=19 // pred_check
          %p120 = pneg %p35
        $region22: #{tpu_custom_call.1} parent=19 // pred_check_branch
          %122 = sbr.rel (%p120) target = $region24
        $region23: #{tpu_custom_call.1} parent=19 // pred_region
          %s123 = sand.u32 %s25, 1
          %s124 = scalar_lea.sflag [#allocation3], %s123
          %s125 = sand.u32 %s25, 1
          %s126 = scalar_lea.vmem [#allocation2], %s125
          %s128 = ssub.s32 16, 16
          %129 = vsyncadd %s124, %s128
          %s130 = smul.addr %s15, 16
          %s131 = scalar_lea.hbm %s0, %s130
          %s133 = sshll.u32 %s126, 4
          %s134 = int_to_ptr.vmem [resolvable:$true] %s133
          %136 = dma.hbm_to_vmem [thread:$0]  %s131, 16, %s134, %s124
        $region24: #{tpu_custom_call.1} parent=19 // pred_fallthru
          _
      $region20: #{tpu_custom_call.1} parent=5 // pred_fallthru
        _
      %p137 = scmp.le.s32.totalorder 1, %s15
      %p138 = scmp.lt.s32.totalorder %s15, 3
      %p139 = pnand %p137, %p138
      %p140 = pneg %p139
      // Predicated region
      $region25: #{tpu_custom_call.1} parent=5 // pred_check
        _
      $region26: #{tpu_custom_call.1} parent=5 // pred_check_branch
        %142 = sbr.rel (%p139) target = $region28
      $region27: #{tpu_custom_call.1} parent=5 // pred_region
        %s143 = ssub.s32 %s15, 1
        %s144 = sand.u32 %s28, 1
        %s145 = scalar_lea.sflag [#allocation3], %s144
        %s146 = sand.u32 %s28, 1
        %s147 = scalar_lea.vmem [#allocation2], %s146
        // Predicated region
        $region29: #{tpu_custom_call.1} parent=27 // pred_check
          %p148 = pneg %p41
        $region30: #{tpu_custom_call.1} parent=27 // pred_check_branch
          %150 = sbr.rel (%p148) target = $region32
        $region31: #{tpu_custom_call.1} parent=27 // pred_region
          %151 = dma.done %s145, 16
        $region32: #{tpu_custom_call.1} parent=27 // pred_fallthru
          _
        // Predicated region
        $region33: #{tpu_custom_call.1} parent=27 // pred_check
          %p152 = pneg %p62
        $region34: #{tpu_custom_call.1} parent=27 // pred_check_branch
          %154 = sbr.rel (%p152) target = $region36
        $region35: #{tpu_custom_call.1} parent=27 // pred_region
          %155 = dma.done [#allocation6], 2048
        $region36: #{tpu_custom_call.1} parent=27 // pred_fallthru
          _
        %s156 = sand.u32 %s28, 1
        %s157 = scalar_lea.sflag [#allocation3], %s156
        %s158 = sand.u32 %s28, 1
        %s159 = scalar_lea.vmem [#allocation2], %s158
        %p160 = pneg %p41
        %p161 = pneg %p38
        %p162 = pneg %p62
        %p163 = pneg %p59
        %p164 = pneg %p88
        %p165 = pneg %p85
        %s166 = sand.u32 %s75, 1
        %s167 = scalar_lea.sflag [#allocation4], %s166
        %s168 = sand.u32 %s75, 1
        %s169 = smul.addr %s168, 32
        %s170 = scalar_lea.vmem [#allocation7], %s169
        %v171 = vld [vmem:[%s147] sm:$0x1]
        %v172 = vrcp.pop 0.019607844
        %v173 = vmul.f32 %v171, %v172
        %v174 = vfloor.f32 %v173
        %v175 = vmax.f32 %v174, 0.0
        %v176 = vmin.f32 %v175, 254.0
        %v177 = vsub.f32 %v173, %v176
        %v178 = vmul.f32 %v177, %v177
        %v179 = vmul.f32 %v178, %v177
        %v180 = vmul.f32 %v179, 2.0
        %v181 = vmul.f32 %v178, 3.0
        %v182 = vsub.f32 %v180, %v181
        %v183 = vadd.f32 %v182, 1.0
        %v184 = vmul.f32 %v178, 2.0
        %v185 = vsub.f32 %v179, %v184
        %v186 = vadd.f32 %v185, %v177
        %v187 = vmul.f32 %v179, -2.0
        %v188 = vadd.f32 %v187, %v181
        %v189 = vsub.f32 %v179, %v178
        %v190 = vcvt.f32.s32.to.zero.pseudo %v176
        %v191 = vlaneseq
        %v192 = vshrl.u32 %v191, 7
        %v193 = vadd.s32 %v192, 8
        %v194 = vadd.s32 %v192, 16
        %v195 = vadd.s32 %v192, 24
        %v196 = vadd.s32 %v192, 32
        %v197 = vadd.s32 %v192, 40
        %v198 = vadd.s32 %v192, 48
        %v199 = vadd.s32 %v192, 56
        %v200 = vadd.s32 %v192, 64
        %v201 = vadd.s32 %v192, 72
        %v202 = vadd.s32 %v192, 80
        %v203 = vadd.s32 %v192, 88
        %v204 = vadd.s32 %v192, 96
        %v205 = vadd.s32 %v192, 104
        %v206 = vadd.s32 %v192, 112
        %v207 = vadd.s32 %v192, 120
        %v208 = vadd.s32 %v192, 128
        %v209 = vadd.s32 %v192, 136
        %v210 = vadd.s32 %v192, 144
        %v211 = vadd.s32 %v192, 152
        %v212 = vadd.s32 %v192, 160
        %v213 = vadd.s32 %v192, 168
        %v214 = vadd.s32 %v192, 176
        %v215 = vadd.s32 %v192, 184
        %v216 = vadd.s32 %v192, 192
        %v217 = vadd.s32 %v192, 200
        %v218 = vadd.s32 %v192, 208
        %v219 = vadd.s32 %v192, 216
        %v220 = vadd.s32 %v192, 224
        %v221 = vadd.s32 %v192, 232
        %v222 = vadd.s32 %v192, 240
        %v223 = vadd.s32 %v192, 248
        %v224 = vadd.s32 %v192, 256
        %v225 = vadd.s32 %v192, 264
        %v226 = vadd.s32 %v192, 272
        %v227 = vadd.s32 %v192, 280
        %v228 = vadd.s32 %v192, 288
        %v229 = vadd.s32 %v192, 296
        %v230 = vadd.s32 %v192, 304
        %v231 = vadd.s32 %v192, 312
        %v232 = vadd.s32 %v192, 320
        %v233 = vadd.s32 %v192, 328
        %v234 = vadd.s32 %v192, 336
        %v235 = vadd.s32 %v192, 344
        %v236 = vadd.s32 %v192, 352
        %v237 = vadd.s32 %v192, 360
        %v238 = vadd.s32 %v192, 368
        %v239 = vadd.s32 %v192, 376
        %v240 = vadd.s32 %v192, 384
        %v241 = vadd.s32 %v192, 392
        %v242 = vadd.s32 %v192, 400
        %v243 = vadd.s32 %v192, 408
        %v244 = vadd.s32 %v192, 416
        %v245 = vadd.s32 %v192, 424
        %v246 = vadd.s32 %v192, 432
        %v247 = vadd.s32 %v192, 440
        %v248 = vadd.s32 %v192, 448
        %v249 = vadd.s32 %v192, 456
        %v250 = vadd.s32 %v192, 464
        %v251 = vadd.s32 %v192, 472
        %v252 = vadd.s32 %v192, 480
        %v253 = vadd.s32 %v192, 488
        %v254 = vadd.s32 %v192, 496
        %v255 = vadd.s32 %v192, 504
        %v256 = vlaneseq
        %v257 = vshrl.u32 %v256, 7
        %v258 = vsub.s32 0, %v257
        %v259 = vrot.slane %v190, %v258
        %vm260 = vcmp.eq.s32.totalorder %v192, %v259
        %vm261 = vcmp.eq.s32.totalorder %v193, %v259
        %vm262 = vcmp.eq.s32.totalorder %v194, %v259
        %vm263 = vcmp.eq.s32.totalorder %v195, %v259
        %vm264 = vcmp.eq.s32.totalorder %v196, %v259
        %vm265 = vcmp.eq.s32.totalorder %v197, %v259
        %vm266 = vcmp.eq.s32.totalorder %v198, %v259
        %vm267 = vcmp.eq.s32.totalorder %v199, %v259
        %vm268 = vcmp.eq.s32.totalorder %v200, %v259
        %vm269 = vcmp.eq.s32.totalorder %v201, %v259
        %vm270 = vcmp.eq.s32.totalorder %v202, %v259
        %vm271 = vcmp.eq.s32.totalorder %v203, %v259
        %vm272 = vcmp.eq.s32.totalorder %v204, %v259
        %vm273 = vcmp.eq.s32.totalorder %v205, %v259
        %vm274 = vcmp.eq.s32.totalorder %v206, %v259
        %vm275 = vcmp.eq.s32.totalorder %v207, %v259
        %vm276 = vcmp.eq.s32.totalorder %v208, %v259
        %vm277 = vcmp.eq.s32.totalorder %v209, %v259
        %vm278 = vcmp.eq.s32.totalorder %v210, %v259
        %vm279 = vcmp.eq.s32.totalorder %v211, %v259
        %vm280 = vcmp.eq.s32.totalorder %v212, %v259
        %vm281 = vcmp.eq.s32.totalorder %v213, %v259
        %vm282 = vcmp.eq.s32.totalorder %v214, %v259
        %vm283 = vcmp.eq.s32.totalorder %v215, %v259
        %vm284 = vcmp.eq.s32.totalorder %v216, %v259
        %vm285 = vcmp.eq.s32.totalorder %v217, %v259
        %vm286 = vcmp.eq.s32.totalorder %v218, %v259
        %vm287 = vcmp.eq.s32.totalorder %v219, %v259
        %vm288 = vcmp.eq.s32.totalorder %v220, %v259
        %vm289 = vcmp.eq.s32.totalorder %v221, %v259
        %vm290 = vcmp.eq.s32.totalorder %v222, %v259
        %vm291 = vcmp.eq.s32.totalorder %v223, %v259
        %vm292 = vcmp.eq.s32.totalorder %v224, %v259
        %vm293 = vcmp.eq.s32.totalorder %v225, %v259
        %vm294 = vcmp.eq.s32.totalorder %v226, %v259
        %vm295 = vcmp.eq.s32.totalorder %v227, %v259
        %vm296 = vcmp.eq.s32.totalorder %v228, %v259
        %vm297 = vcmp.eq.s32.totalorder %v229, %v259
        %vm298 = vcmp.eq.s32.totalorder %v230, %v259
        %vm299 = vcmp.eq.s32.totalorder %v231, %v259
        %vm300 = vcmp.eq.s32.totalorder %v232, %v259
        %vm301 = vcmp.eq.s32.totalorder %v233, %v259
        %vm302 = vcmp.eq.s32.totalorder %v234, %v259
        %vm303 = vcmp.eq.s32.totalorder %v235, %v259
        %vm304 = vcmp.eq.s32.totalorder %v236, %v259
        %vm305 = vcmp.eq.s32.totalorder %v237, %v259
        %vm306 = vcmp.eq.s32.totalorder %v238, %v259
        %vm307 = vcmp.eq.s32.totalorder %v239, %v259
        %vm308 = vcmp.eq.s32.totalorder %v240, %v259
        %vm309 = vcmp.eq.s32.totalorder %v241, %v259
        %vm310 = vcmp.eq.s32.totalorder %v242, %v259
        %vm311 = vcmp.eq.s32.totalorder %v243, %v259
        %vm312 = vcmp.eq.s32.totalorder %v244, %v259
        %vm313 = vcmp.eq.s32.totalorder %v245, %v259
        %vm314 = vcmp.eq.s32.totalorder %v246, %v259
        %vm315 = vcmp.eq.s32.totalorder %v247, %v259
        %vm316 = vcmp.eq.s32.totalorder %v248, %v259
        %vm317 = vcmp.eq.s32.totalorder %v249, %v259
        %vm318 = vcmp.eq.s32.totalorder %v250, %v259
        %vm319 = vcmp.eq.s32.totalorder %v251, %v259
        %vm320 = vcmp.eq.s32.totalorder %v252, %v259
        %vm321 = vcmp.eq.s32.totalorder %v253, %v259
        %vm322 = vcmp.eq.s32.totalorder %v254, %v259
        %vm323 = vcmp.eq.s32.totalorder %v255, %v259
        %v324 = vadd.s32 %v190, 1
        %v325 = vlaneseq
        %v326 = vshrl.u32 %v325, 7
        %v327 = vsub.s32 0, %v326
        %v328 = vrot.slane %v324, %v327
        %vm329 = vcmp.eq.s32.totalorder %v192, %v328
        %vm330 = vcmp.eq.s32.totalorder %v193, %v328
        %vm331 = vcmp.eq.s32.totalorder %v194, %v328
        %vm332 = vcmp.eq.s32.totalorder %v195, %v328
        %vm333 = vcmp.eq.s32.totalorder %v196, %v328
        %vm334 = vcmp.eq.s32.totalorder %v197, %v328
        %vm335 = vcmp.eq.s32.totalorder %v198, %v328
        %vm336 = vcmp.eq.s32.totalorder %v199, %v328
        %vm337 = vcmp.eq.s32.totalorder %v200, %v328
        %vm338 = vcmp.eq.s32.totalorder %v201, %v328
        %vm339 = vcmp.eq.s32.totalorder %v202, %v328
        %vm340 = vcmp.eq.s32.totalorder %v203, %v328
        %vm341 = vcmp.eq.s32.totalorder %v204, %v328
        %vm342 = vcmp.eq.s32.totalorder %v205, %v328
        %vm343 = vcmp.eq.s32.totalorder %v206, %v328
        %vm344 = vcmp.eq.s32.totalorder %v207, %v328
        %vm345 = vcmp.eq.s32.totalorder %v208, %v328
        %vm346 = vcmp.eq.s32.totalorder %v209, %v328
        %vm347 = vcmp.eq.s32.totalorder %v210, %v328
        %vm348 = vcmp.eq.s32.totalorder %v211, %v328
        %vm349 = vcmp.eq.s32.totalorder %v212, %v328
        %vm350 = vcmp.eq.s32.totalorder %v213, %v328
        %vm351 = vcmp.eq.s32.totalorder %v214, %v328
        %vm352 = vcmp.eq.s32.totalorder %v215, %v328
        %vm353 = vcmp.eq.s32.totalorder %v216, %v328
        %vm354 = vcmp.eq.s32.totalorder %v217, %v328
        %vm355 = vcmp.eq.s32.totalorder %v218, %v328
        %vm356 = vcmp.eq.s32.totalorder %v219, %v328
        %vm357 = vcmp.eq.s32.totalorder %v220, %v328
        %vm358 = vcmp.eq.s32.totalorder %v221, %v328
        %vm359 = vcmp.eq.s32.totalorder %v222, %v328
        %vm360 = vcmp.eq.s32.totalorder %v223, %v328
        %vm361 = vcmp.eq.s32.totalorder %v224, %v328
        %vm362 = vcmp.eq.s32.totalorder %v225, %v328
        %vm363 = vcmp.eq.s32.totalorder %v226, %v328
        %vm364 = vcmp.eq.s32.totalorder %v227, %v328
        %vm365 = vcmp.eq.s32.totalorder %v228, %v328
        %vm366 = vcmp.eq.s32.totalorder %v229, %v328
        %vm367 = vcmp.eq.s32.totalorder %v230, %v328
        %vm368 = vcmp.eq.s32.totalorder %v231, %v328
        %vm369 = vcmp.eq.s32.totalorder %v232, %v328
        %vm370 = vcmp.eq.s32.totalorder %v233, %v328
        %vm371 = vcmp.eq.s32.totalorder %v234, %v328
        %vm372 = vcmp.eq.s32.totalorder %v235, %v328
        %vm373 = vcmp.eq.s32.totalorder %v236, %v328
        %vm374 = vcmp.eq.s32.totalorder %v237, %v328
        %vm375 = vcmp.eq.s32.totalorder %v238, %v328
        %vm376 = vcmp.eq.s32.totalorder %v239, %v328
        %vm377 = vcmp.eq.s32.totalorder %v240, %v328
        %vm378 = vcmp.eq.s32.totalorder %v241, %v328
        %vm379 = vcmp.eq.s32.totalorder %v242, %v328
        %vm380 = vcmp.eq.s32.totalorder %v243, %v328
        %vm381 = vcmp.eq.s32.totalorder %v244, %v328
        %vm382 = vcmp.eq.s32.totalorder %v245, %v328
        %vm383 = vcmp.eq.s32.totalorder %v246, %v328
        %vm384 = vcmp.eq.s32.totalorder %v247, %v328
        %vm385 = vcmp.eq.s32.totalorder %v248, %v328
        %vm386 = vcmp.eq.s32.totalorder %v249, %v328
        %vm387 = vcmp.eq.s32.totalorder %v250, %v328
        %vm388 = vcmp.eq.s32.totalorder %v251, %v328
        %vm389 = vcmp.eq.s32.totalorder %v252, %v328
        %vm390 = vcmp.eq.s32.totalorder %v253, %v328
        %vm391 = vcmp.eq.s32.totalorder %v254, %v328
        %vm392 = vcmp.eq.s32.totalorder %v255, %v328
        %v393 = vadd.s32 %v190, 256
        %v394 = vlaneseq
        %v395 = vshrl.u32 %v394, 7
        %v396 = vsub.s32 0, %v395
        %v397 = vrot.slane %v393, %v396
        %vm398 = vcmp.eq.s32.totalorder %v192, %v397
        %vm399 = vcmp.eq.s32.totalorder %v193, %v397
        %vm400 = vcmp.eq.s32.totalorder %v194, %v397
        %vm401 = vcmp.eq.s32.totalorder %v195, %v397
        %vm402 = vcmp.eq.s32.totalorder %v196, %v397
        %vm403 = vcmp.eq.s32.totalorder %v197, %v397
        %vm404 = vcmp.eq.s32.totalorder %v198, %v397
        %vm405 = vcmp.eq.s32.totalorder %v199, %v397
        %vm406 = vcmp.eq.s32.totalorder %v200, %v397
        %vm407 = vcmp.eq.s32.totalorder %v201, %v397
        %vm408 = vcmp.eq.s32.totalorder %v202, %v397
        %vm409 = vcmp.eq.s32.totalorder %v203, %v397
        %vm410 = vcmp.eq.s32.totalorder %v204, %v397
        %vm411 = vcmp.eq.s32.totalorder %v205, %v397
        %vm412 = vcmp.eq.s32.totalorder %v206, %v397
        %vm413 = vcmp.eq.s32.totalorder %v207, %v397
        %vm414 = vcmp.eq.s32.totalorder %v208, %v397
        %vm415 = vcmp.eq.s32.totalorder %v209, %v397
        %vm416 = vcmp.eq.s32.totalorder %v210, %v397
        %vm417 = vcmp.eq.s32.totalorder %v211, %v397
        %vm418 = vcmp.eq.s32.totalorder %v212, %v397
        %vm419 = vcmp.eq.s32.totalorder %v213, %v397
        %vm420 = vcmp.eq.s32.totalorder %v214, %v397
        %vm421 = vcmp.eq.s32.totalorder %v215, %v397
        %vm422 = vcmp.eq.s32.totalorder %v216, %v397
        %vm423 = vcmp.eq.s32.totalorder %v217, %v397
        %vm424 = vcmp.eq.s32.totalorder %v218, %v397
        %vm425 = vcmp.eq.s32.totalorder %v219, %v397
        %vm426 = vcmp.eq.s32.totalorder %v220, %v397
        %vm427 = vcmp.eq.s32.totalorder %v221, %v397
        %vm428 = vcmp.eq.s32.totalorder %v222, %v397
        %vm429 = vcmp.eq.s32.totalorder %v223, %v397
        %vm430 = vcmp.eq.s32.totalorder %v224, %v397
        %vm431 = vcmp.eq.s32.totalorder %v225, %v397
        %vm432 = vcmp.eq.s32.totalorder %v226, %v397
        %vm433 = vcmp.eq.s32.totalorder %v227, %v397
        %vm434 = vcmp.eq.s32.totalorder %v228, %v397
        %vm435 = vcmp.eq.s32.totalorder %v229, %v397
        %vm436 = vcmp.eq.s32.totalorder %v230, %v397
        %vm437 = vcmp.eq.s32.totalorder %v231, %v397
        %vm438 = vcmp.eq.s32.totalorder %v232, %v397
        %vm439 = vcmp.eq.s32.totalorder %v233, %v397
        %vm440 = vcmp.eq.s32.totalorder %v234, %v397
        %vm441 = vcmp.eq.s32.totalorder %v235, %v397
        %vm442 = vcmp.eq.s32.totalorder %v236, %v397
        %vm443 = vcmp.eq.s32.totalorder %v237, %v397
        %vm444 = vcmp.eq.s32.totalorder %v238, %v397
        %vm445 = vcmp.eq.s32.totalorder %v239, %v397
        %vm446 = vcmp.eq.s32.totalorder %v240, %v397
        %vm447 = vcmp.eq.s32.totalorder %v241, %v397
        %vm448 = vcmp.eq.s32.totalorder %v242, %v397
        %vm449 = vcmp.eq.s32.totalorder %v243, %v397
        %vm450 = vcmp.eq.s32.totalorder %v244, %v397
        %vm451 = vcmp.eq.s32.totalorder %v245, %v397
        %vm452 = vcmp.eq.s32.totalorder %v246, %v397
        %vm453 = vcmp.eq.s32.totalorder %v247, %v397
        %vm454 = vcmp.eq.s32.totalorder %v248, %v397
        %vm455 = vcmp.eq.s32.totalorder %v249, %v397
        %vm456 = vcmp.eq.s32.totalorder %v250, %v397
        %vm457 = vcmp.eq.s32.totalorder %v251, %v397
        %vm458 = vcmp.eq.s32.totalorder %v252, %v397
        %vm459 = vcmp.eq.s32.totalorder %v253, %v397
        %vm460 = vcmp.eq.s32.totalorder %v254, %v397
        %vm461 = vcmp.eq.s32.totalorder %v255, %v397
        %v462 = vadd.s32 %v393, 1
        %v463 = vlaneseq
        %v464 = vshrl.u32 %v463, 7
        %v465 = vsub.s32 0, %v464
        %v466 = vrot.slane %v462, %v465
        %vm467 = vcmp.eq.s32.totalorder %v192, %v466
        %vm468 = vcmp.eq.s32.totalorder %v193, %v466
        %vm469 = vcmp.eq.s32.totalorder %v194, %v466
        %vm470 = vcmp.eq.s32.totalorder %v195, %v466
        %vm471 = vcmp.eq.s32.totalorder %v196, %v466
        %vm472 = vcmp.eq.s32.totalorder %v197, %v466
        %vm473 = vcmp.eq.s32.totalorder %v198, %v466
        %vm474 = vcmp.eq.s32.totalorder %v199, %v466
        %vm475 = vcmp.eq.s32.totalorder %v200, %v466
        %vm476 = vcmp.eq.s32.totalorder %v201, %v466
        %vm477 = vcmp.eq.s32.totalorder %v202, %v466
        %vm478 = vcmp.eq.s32.totalorder %v203, %v466
        %vm479 = vcmp.eq.s32.totalorder %v204, %v466
        %vm480 = vcmp.eq.s32.totalorder %v205, %v466
        %vm481 = vcmp.eq.s32.totalorder %v206, %v466
        %vm482 = vcmp.eq.s32.totalorder %v207, %v466
        %vm483 = vcmp.eq.s32.totalorder %v208, %v466
        %vm484 = vcmp.eq.s32.totalorder %v209, %v466
        %vm485 = vcmp.eq.s32.totalorder %v210, %v466
        %vm486 = vcmp.eq.s32.totalorder %v211, %v466
        %vm487 = vcmp.eq.s32.totalorder %v212, %v466
        %vm488 = vcmp.eq.s32.totalorder %v213, %v466
        %vm489 = vcmp.eq.s32.totalorder %v214, %v466
        %vm490 = vcmp.eq.s32.totalorder %v215, %v466
        %vm491 = vcmp.eq.s32.totalorder %v216, %v466
        %vm492 = vcmp.eq.s32.totalorder %v217, %v466
        %vm493 = vcmp.eq.s32.totalorder %v218, %v466
        %vm494 = vcmp.eq.s32.totalorder %v219, %v466
        %vm495 = vcmp.eq.s32.totalorder %v220, %v466
        %vm496 = vcmp.eq.s32.totalorder %v221, %v466
        %vm497 = vcmp.eq.s32.totalorder %v222, %v466
        %vm498 = vcmp.eq.s32.totalorder %v223, %v466
        %vm499 = vcmp.eq.s32.totalorder %v224, %v466
        %vm500 = vcmp.eq.s32.totalorder %v225, %v466
        %vm501 = vcmp.eq.s32.totalorder %v226, %v466
        %vm502 = vcmp.eq.s32.totalorder %v227, %v466
        %vm503 = vcmp.eq.s32.totalorder %v228, %v466
        %vm504 = vcmp.eq.s32.totalorder %v229, %v466
        %vm505 = vcmp.eq.s32.totalorder %v230, %v466
        %vm506 = vcmp.eq.s32.totalorder %v231, %v466
        %vm507 = vcmp.eq.s32.totalorder %v232, %v466
        %vm508 = vcmp.eq.s32.totalorder %v233, %v466
        %vm509 = vcmp.eq.s32.totalorder %v234, %v466
        %vm510 = vcmp.eq.s32.totalorder %v235, %v466
        %vm511 = vcmp.eq.s32.totalorder %v236, %v466
        %vm512 = vcmp.eq.s32.totalorder %v237, %v466
        %vm513 = vcmp.eq.s32.totalorder %v238, %v466
        %vm514 = vcmp.eq.s32.totalorder %v239, %v466
        %vm515 = vcmp.eq.s32.totalorder %v240, %v466
        %vm516 = vcmp.eq.s32.totalorder %v241, %v466
        %vm517 = vcmp.eq.s32.totalorder %v242, %v466
        %vm518 = vcmp.eq.s32.totalorder %v243, %v466
        %vm519 = vcmp.eq.s32.totalorder %v244, %v466
        %vm520 = vcmp.eq.s32.totalorder %v245, %v466
        %vm521 = vcmp.eq.s32.totalorder %v246, %v466
        %vm522 = vcmp.eq.s32.totalorder %v247, %v466
        %vm523 = vcmp.eq.s32.totalorder %v248, %v466
        %vm524 = vcmp.eq.s32.totalorder %v249, %v466
        %vm525 = vcmp.eq.s32.totalorder %v250, %v466
        %vm526 = vcmp.eq.s32.totalorder %v251, %v466
        %vm527 = vcmp.eq.s32.totalorder %v252, %v466
        %vm528 = vcmp.eq.s32.totalorder %v253, %v466
        %vm529 = vcmp.eq.s32.totalorder %v254, %v466
        %vm530 = vcmp.eq.s32.totalorder %v255, %v466
        %v532 = vlaneseq
        %v533 = vshrl.u32 %v532, 7
        %v534 = vsub.s32 0, %v533
        %v535 = vrot.slane %v189, %v534
        %v537 = vsel %vm467, %v535, 0.0
        %v538 = vsel %vm468, %v535, 0.0
        %v539 = vsel %vm469, %v535, 0.0
        %v540 = vsel %vm470, %v535, 0.0
        %v541 = vsel %vm471, %v535, 0.0
        %v542 = vsel %vm472, %v535, 0.0
        %v543 = vsel %vm473, %v535, 0.0
        %v544 = vsel %vm474, %v535, 0.0
        %v545 = vsel %vm475, %v535, 0.0
        %v546 = vsel %vm476, %v535, 0.0
        %v547 = vsel %vm477, %v535, 0.0
        %v548 = vsel %vm478, %v535, 0.0
        %v549 = vsel %vm479, %v535, 0.0
        %v550 = vsel %vm480, %v535, 0.0
        %v551 = vsel %vm481, %v535, 0.0
        %v552 = vsel %vm482, %v535, 0.0
        %v553 = vsel %vm483, %v535, 0.0
        %v554 = vsel %vm484, %v535, 0.0
        %v555 = vsel %vm485, %v535, 0.0
        %v556 = vsel %vm486, %v535, 0.0
        %v557 = vsel %vm487, %v535, 0.0
        %v558 = vsel %vm488, %v535, 0.0
        %v559 = vsel %vm489, %v535, 0.0
        %v560 = vsel %vm490, %v535, 0.0
        %v561 = vsel %vm491, %v535, 0.0
        %v562 = vsel %vm492, %v535, 0.0
        %v563 = vsel %vm493, %v535, 0.0
        %v564 = vsel %vm494, %v535, 0.0
        %v565 = vsel %vm495, %v535, 0.0
        %v566 = vsel %vm496, %v535, 0.0
        %v567 = vsel %vm497, %v535, 0.0
        %v568 = vsel %vm498, %v535, 0.0
        %v569 = vsel %vm499, %v535, 0.0
        %v570 = vsel %vm500, %v535, 0.0
        %v571 = vsel %vm501, %v535, 0.0
        %v572 = vsel %vm502, %v535, 0.0
        %v573 = vsel %vm503, %v535, 0.0
        %v574 = vsel %vm504, %v535, 0.0
        %v575 = vsel %vm505, %v535, 0.0
        %v576 = vsel %vm506, %v535, 0.0
        %v577 = vsel %vm507, %v535, 0.0
        %v578 = vsel %vm508, %v535, 0.0
        %v579 = vsel %vm509, %v535, 0.0
        %v580 = vsel %vm510, %v535, 0.0
        %v581 = vsel %vm511, %v535, 0.0
        %v582 = vsel %vm512, %v535, 0.0
        %v583 = vsel %vm513, %v535, 0.0
        %v584 = vsel %vm514, %v535, 0.0
        %v585 = vsel %vm515, %v535, 0.0
        %v586 = vsel %vm516, %v535, 0.0
        %v587 = vsel %vm517, %v535, 0.0
        %v588 = vsel %vm518, %v535, 0.0
        %v589 = vsel %vm519, %v535, 0.0
        %v590 = vsel %vm520, %v535, 0.0
        %v591 = vsel %vm521, %v535, 0.0
        %v592 = vsel %vm522, %v535, 0.0
        %v593 = vsel %vm523, %v535, 0.0
        %v594 = vsel %vm524, %v535, 0.0
        %v595 = vsel %vm525, %v535, 0.0
        %v596 = vsel %vm526, %v535, 0.0
        %v597 = vsel %vm527, %v535, 0.0
        %v598 = vsel %vm528, %v535, 0.0
        %v599 = vsel %vm529, %v535, 0.0
        %v600 = vsel %vm530, %v535, 0.0
        %v602 = vlaneseq
        %v603 = vshrl.u32 %v602, 7
        %v604 = vsub.s32 0, %v603
        %v605 = vrot.slane %v186, %v604
        %v607 = vsel %vm398, %v605, %v537
        %v608 = vsel %vm399, %v605, %v538
        %v609 = vsel %vm400, %v605, %v539
        %v610 = vsel %vm401, %v605, %v540
        %v611 = vsel %vm402, %v605, %v541
        %v612 = vsel %vm403, %v605, %v542
        %v613 = vsel %vm404, %v605, %v543
        %v614 = vsel %vm405, %v605, %v544
        %v615 = vsel %vm406, %v605, %v545
        %v616 = vsel %vm407, %v605, %v546
        %v617 = vsel %vm408, %v605, %v547
        %v618 = vsel %vm409, %v605, %v548
        %v619 = vsel %vm410, %v605, %v549
        %v620 = vsel %vm411, %v605, %v550
        %v621 = vsel %vm412, %v605, %v551
        %v622 = vsel %vm413, %v605, %v552
        %v623 = vsel %vm414, %v605, %v553
        %v624 = vsel %vm415, %v605, %v554
        %v625 = vsel %vm416, %v605, %v555
        %v626 = vsel %vm417, %v605, %v556
        %v627 = vsel %vm418, %v605, %v557
        %v628 = vsel %vm419, %v605, %v558
        %v629 = vsel %vm420, %v605, %v559
        %v630 = vsel %vm421, %v605, %v560
        %v631 = vsel %vm422, %v605, %v561
        %v632 = vsel %vm423, %v605, %v562
        %v633 = vsel %vm424, %v605, %v563
        %v634 = vsel %vm425, %v605, %v564
        %v635 = vsel %vm426, %v605, %v565
        %v636 = vsel %vm427, %v605, %v566
        %v637 = vsel %vm428, %v605, %v567
        %v638 = vsel %vm429, %v605, %v568
        %v639 = vsel %vm430, %v605, %v569
        %v640 = vsel %vm431, %v605, %v570
        %v641 = vsel %vm432, %v605, %v571
        %v642 = vsel %vm433, %v605, %v572
        %v643 = vsel %vm434, %v605, %v573
        %v644 = vsel %vm435, %v605, %v574
        %v645 = vsel %vm436, %v605, %v575
        %v646 = vsel %vm437, %v605, %v576
        %v647 = vsel %vm438, %v605, %v577
        %v648 = vsel %vm439, %v605, %v578
        %v649 = vsel %vm440, %v605, %v579
        %v650 = vsel %vm441, %v605, %v580
        %v651 = vsel %vm442, %v605, %v581
        %v652 = vsel %vm443, %v605, %v582
        %v653 = vsel %vm444, %v605, %v583
        %v654 = vsel %vm445, %v605, %v584
        %v655 = vsel %vm446, %v605, %v585
        %v656 = vsel %vm447, %v605, %v586
        %v657 = vsel %vm448, %v605, %v587
        %v658 = vsel %vm449, %v605, %v588
        %v659 = vsel %vm450, %v605, %v589
        %v660 = vsel %vm451, %v605, %v590
        %v661 = vsel %vm452, %v605, %v591
        %v662 = vsel %vm453, %v605, %v592
        %v663 = vsel %vm454, %v605, %v593
        %v664 = vsel %vm455, %v605, %v594
        %v665 = vsel %vm456, %v605, %v595
        %v666 = vsel %vm457, %v605, %v596
        %v667 = vsel %vm458, %v605, %v597
        %v668 = vsel %vm459, %v605, %v598
        %v669 = vsel %vm460, %v605, %v599
        %v670 = vsel %vm461, %v605, %v600
        %v672 = vlaneseq
        %v673 = vshrl.u32 %v672, 7
        %v674 = vsub.s32 0, %v673
        %v675 = vrot.slane %v188, %v674
        %v677 = vsel %vm329, %v675, %v607
        %v678 = vsel %vm330, %v675, %v608
        %v679 = vsel %vm331, %v675, %v609
        %v680 = vsel %vm332, %v675, %v610
        %v681 = vsel %vm333, %v675, %v611
        %v682 = vsel %vm334, %v675, %v612
        %v683 = vsel %vm335, %v675, %v613
        %v684 = vsel %vm336, %v675, %v614
        %v685 = vsel %vm337, %v675, %v615
        %v686 = vsel %vm338, %v675, %v616
        %v687 = vsel %vm339, %v675, %v617
        %v688 = vsel %vm340, %v675, %v618
        %v689 = vsel %vm341, %v675, %v619
        %v690 = vsel %vm342, %v675, %v620
        %v691 = vsel %vm343, %v675, %v621
        %v692 = vsel %vm344, %v675, %v622
        %v693 = vsel %vm345, %v675, %v623
        %v694 = vsel %vm346, %v675, %v624
        %v695 = vsel %vm347, %v675, %v625
        %v696 = vsel %vm348, %v675, %v626
        %v697 = vsel %vm349, %v675, %v627
        %v698 = vsel %vm350, %v675, %v628
        %v699 = vsel %vm351, %v675, %v629
        %v700 = vsel %vm352, %v675, %v630
        %v701 = vsel %vm353, %v675, %v631
        %v702 = vsel %vm354, %v675, %v632
        %v703 = vsel %vm355, %v675, %v633
        %v704 = vsel %vm356, %v675, %v634
        %v705 = vsel %vm357, %v675, %v635
        %v706 = vsel %vm358, %v675, %v636
        %v707 = vsel %vm359, %v675, %v637
        %v708 = vsel %vm360, %v675, %v638
        %v709 = vsel %vm361, %v675, %v639
        %v710 = vsel %vm362, %v675, %v640
        %v711 = vsel %vm363, %v675, %v641
        %v712 = vsel %vm364, %v675, %v642
        %v713 = vsel %vm365, %v675, %v643
        %v714 = vsel %vm366, %v675, %v644
        %v715 = vsel %vm367, %v675, %v645
        %v716 = vsel %vm368, %v675, %v646
        %v717 = vsel %vm369, %v675, %v647
        %v718 = vsel %vm370, %v675, %v648
        %v719 = vsel %vm371, %v675, %v649
        %v720 = vsel %vm372, %v675, %v650
        %v721 = vsel %vm373, %v675, %v651
        %v722 = vsel %vm374, %v675, %v652
        %v723 = vsel %vm375, %v675, %v653
        %v724 = vsel %vm376, %v675, %v654
        %v725 = vsel %vm377, %v675, %v655
        %v726 = vsel %vm378, %v675, %v656
        %v727 = vsel %vm379, %v675, %v657
        %v728 = vsel %vm380, %v675, %v658
        %v729 = vsel %vm381, %v675, %v659
        %v730 = vsel %vm382, %v675, %v660
        %v731 = vsel %vm383, %v675, %v661
        %v732 = vsel %vm384, %v675, %v662
        %v733 = vsel %vm385, %v675, %v663
        %v734 = vsel %vm386, %v675, %v664
        %v735 = vsel %vm387, %v675, %v665
        %v736 = vsel %vm388, %v675, %v666
        %v737 = vsel %vm389, %v675, %v667
        %v738 = vsel %vm390, %v675, %v668
        %v739 = vsel %vm391, %v675, %v669
        %v740 = vsel %vm392, %v675, %v670
        %v742 = vlaneseq
        %v743 = vshrl.u32 %v742, 7
        %v744 = vsub.s32 0, %v743
        %v745 = vrot.slane %v183, %v744
        %v747 = vsel %vm260, %v745, %v677
        %v748 = vsel %vm261, %v745, %v678
        %v749 = vsel %vm262, %v745, %v679
        %v750 = vsel %vm263, %v745, %v680
        %v751 = vsel %vm264, %v745, %v681
        %v752 = vsel %vm265, %v745, %v682
        %v753 = vsel %vm266, %v745, %v683
        %v754 = vsel %vm267, %v745, %v684
        %v755 = vsel %vm268, %v745, %v685
        %v756 = vsel %vm269, %v745, %v686
        %v757 = vsel %vm270, %v745, %v687
        %v758 = vsel %vm271, %v745, %v688
        %v759 = vsel %vm272, %v745, %v689
        %v760 = vsel %vm273, %v745, %v690
        %v761 = vsel %vm274, %v745, %v691
        %v762 = vsel %vm275, %v745, %v692
        %v763 = vsel %vm276, %v745, %v693
        %v764 = vsel %vm277, %v745, %v694
        %v765 = vsel %vm278, %v745, %v695
        %v766 = vsel %vm279, %v745, %v696
        %v767 = vsel %vm280, %v745, %v697
        %v768 = vsel %vm281, %v745, %v698
        %v769 = vsel %vm282, %v745, %v699
        %v770 = vsel %vm283, %v745, %v700
        %v771 = vsel %vm284, %v745, %v701
        %v772 = vsel %vm285, %v745, %v702
        %v773 = vsel %vm286, %v745, %v703
        %v774 = vsel %vm287, %v745, %v704
        %v775 = vsel %vm288, %v745, %v705
        %v776 = vsel %vm289, %v745, %v706
        %v777 = vsel %vm290, %v745, %v707
        %v778 = vsel %vm291, %v745, %v708
        %v779 = vsel %vm292, %v745, %v709
        %v780 = vsel %vm293, %v745, %v710
        %v781 = vsel %vm294, %v745, %v711
        %v782 = vsel %vm295, %v745, %v712
        %v783 = vsel %vm296, %v745, %v713
        %v784 = vsel %vm297, %v745, %v714
        %v785 = vsel %vm298, %v745, %v715
        %v786 = vsel %vm299, %v745, %v716
        %v787 = vsel %vm300, %v745, %v717
        %v788 = vsel %vm301, %v745, %v718
        %v789 = vsel %vm302, %v745, %v719
        %v790 = vsel %vm303, %v745, %v720
        %v791 = vsel %vm304, %v745, %v721
        %v792 = vsel %vm305, %v745, %v722
        %v793 = vsel %vm306, %v745, %v723
        %v794 = vsel %vm307, %v745, %v724
        %v795 = vsel %vm308, %v745, %v725
        %v796 = vsel %vm309, %v745, %v726
        %v797 = vsel %vm310, %v745, %v727
        %v798 = vsel %vm311, %v745, %v728
        %v799 = vsel %vm312, %v745, %v729
        %v800 = vsel %vm313, %v745, %v730
        %v801 = vsel %vm314, %v745, %v731
        %v802 = vsel %vm315, %v745, %v732
        %v803 = vsel %vm316, %v745, %v733
        %v804 = vsel %vm317, %v745, %v734
        %v805 = vsel %vm318, %v745, %v735
        %v806 = vsel %vm319, %v745, %v736
        %v807 = vsel %vm320, %v745, %v737
        %v808 = vsel %vm321, %v745, %v738
        %v809 = vsel %vm322, %v745, %v739
        %v810 = vsel %vm323, %v745, %v740
        %v811 = vld [vmem:[#allocation5] sm:$0xff]
        %v812 = vld [vmem:[#allocation5 + $0x8] sm:$0xff]
        %v813 = vld [vmem:[#allocation5 + $0x10] sm:$0xff]
        %v814 = vld [vmem:[#allocation5 + $0x18] sm:$0xff]
        %v815 = vld [vmem:[#allocation5 + $0x20] sm:$0xff]
        %v816 = vld [vmem:[#allocation5 + $0x28] sm:$0xff]
        %v817 = vld [vmem:[#allocation5 + $0x30] sm:$0xff]
        %v818 = vld [vmem:[#allocation5 + $0x38] sm:$0xff]
        %v819 = vld [vmem:[#allocation5 + $0x40] sm:$0xff]
        %v820 = vld [vmem:[#allocation5 + $0x48] sm:$0xff]
        %v821 = vld [vmem:[#allocation5 + $0x50] sm:$0xff]
        %v822 = vld [vmem:[#allocation5 + $0x58] sm:$0xff]
        %v823 = vld [vmem:[#allocation5 + $0x60] sm:$0xff]
        %v824 = vld [vmem:[#allocation5 + $0x68] sm:$0xff]
        %v825 = vld [vmem:[#allocation5 + $0x70] sm:$0xff]
        %v826 = vld [vmem:[#allocation5 + $0x78] sm:$0xff]
        %827 = vmatprep.subr.mxu0 0.0
        %v828 = vand.u32 %v747, 4294901760
        %829 = vmatpush1.msra.mxu0 %v828
        %830 = vmatprep.subr.mxu0 0.0
        %v831 = vand.u32 %v748, 4294901760
        %832 = vmatpush1.msra.mxu0 %v831
        %833 = vmatprep.subr.mxu0 0.0
        %v834 = vand.u32 %v749, 4294901760
        %835 = vmatpush1.msra.mxu0 %v834
        %836 = vmatprep.subr.mxu0 0.0
        %v837 = vand.u32 %v750, 4294901760
        %838 = vmatpush1.msra.mxu0 %v837
        %839 = vmatprep.subr.mxu0 0.0
        %v840 = vand.u32 %v751, 4294901760
        %841 = vmatpush1.msra.mxu0 %v840
        %842 = vmatprep.subr.mxu0 0.0
        %v843 = vand.u32 %v752, 4294901760
        %844 = vmatpush1.msra.mxu0 %v843
        %845 = vmatprep.subr.mxu0 0.0
        %v846 = vand.u32 %v753, 4294901760
        %847 = vmatpush1.msra.mxu0 %v846
        %848 = vmatprep.subr.mxu0 0.0
        %v849 = vand.u32 %v754, 4294901760
        %850 = vmatpush1.msra.mxu0 %v849
        %851 = vmatprep.subr.mxu0 0.0
        %v852 = vand.u32 %v755, 4294901760
        %853 = vmatpush1.msra.mxu0 %v852
        %854 = vmatprep.subr.mxu0 0.0
        %v855 = vand.u32 %v756, 4294901760
        %856 = vmatpush1.msra.mxu0 %v855
        %857 = vmatprep.subr.mxu0 0.0
        %v858 = vand.u32 %v757, 4294901760
        %859 = vmatpush1.msra.mxu0 %v858
        %860 = vmatprep.subr.mxu0 0.0
        %v861 = vand.u32 %v758, 4294901760
        %862 = vmatpush1.msra.mxu0 %v861
        %863 = vmatprep.subr.mxu0 0.0
        %v864 = vand.u32 %v759, 4294901760
        %865 = vmatpush1.msra.mxu0 %v864
        %866 = vmatprep.subr.mxu0 0.0
        %v867 = vand.u32 %v760, 4294901760
        %868 = vmatpush1.msra.mxu0 %v867
        %869 = vmatprep.subr.mxu0 0.0
        %v870 = vand.u32 %v761, 4294901760
        %871 = vmatpush1.msra.mxu0 %v870
        %872 = vmatprep.subr.mxu0 0.0
        %v873 = vand.u32 %v762, 4294901760
        %874 = vmatpush1.msra.mxu0 %v873
        %875 = vmatprep.subr.mxu0 0.0
        %v876 = vand.u32 %v763, 4294901760
        %877 = vmatpush1.msra.mxu0 %v876
        %878 = vmatprep.subr.mxu0 0.0
        %v879 = vand.u32 %v764, 4294901760
        %880 = vmatpush1.msra.mxu0 %v879
        %881 = vmatprep.subr.mxu0 0.0
        %v882 = vand.u32 %v765, 4294901760
        %883 = vmatpush1.msra.mxu0 %v882
        %884 = vmatprep.subr.mxu0 0.0
        %v885 = vand.u32 %v766, 4294901760
        %886 = vmatpush1.msra.mxu0 %v885
        %887 = vmatprep.subr.mxu0 0.0
        %v888 = vand.u32 %v767, 4294901760
        %889 = vmatpush1.msra.mxu0 %v888
        %890 = vmatprep.subr.mxu0 0.0
        %v891 = vand.u32 %v768, 4294901760
        %892 = vmatpush1.msra.mxu0 %v891
        %893 = vmatprep.subr.mxu0 0.0
        %v894 = vand.u32 %v769, 4294901760
        %895 = vmatpush1.msra.mxu0 %v894
        %896 = vmatprep.subr.mxu0 0.0
        %v897 = vand.u32 %v770, 4294901760
        %898 = vmatpush1.msra.mxu0 %v897
        %899 = vmatprep.subr.mxu0 0.0
        %v900 = vand.u32 %v771, 4294901760
        %901 = vmatpush1.msra.mxu0 %v900
        %902 = vmatprep.subr.mxu0 0.0
        %v903 = vand.u32 %v772, 4294901760
        %904 = vmatpush1.msra.mxu0 %v903
        %905 = vmatprep.subr.mxu0 0.0
        %v906 = vand.u32 %v773, 4294901760
        %907 = vmatpush1.msra.mxu0 %v906
        %908 = vmatprep.subr.mxu0 0.0
        %v909 = vand.u32 %v774, 4294901760
        %910 = vmatpush1.msra.mxu0 %v909
        %911 = vmatprep.subr.mxu0 0.0
        %v912 = vand.u32 %v775, 4294901760
        %913 = vmatpush1.msra.mxu0 %v912
        %914 = vmatprep.subr.mxu0 0.0
        %v915 = vand.u32 %v776, 4294901760
        %916 = vmatpush1.msra.mxu0 %v915
        %917 = vmatprep.subr.mxu0 0.0
        %v918 = vand.u32 %v777, 4294901760
        %919 = vmatpush1.msra.mxu0 %v918
        %920 = vmatprep.subr.mxu0 0.0
        %v921 = vand.u32 %v778, 4294901760
        %922 = vmatpush1.msra.mxu0 %v921
        %v923 = vand.u32 %v812, 4294901760
        %v924 = vsub.f32 %v812, %v923
        %v925 = vand.u32 %v924, 4294901760
        %v926 = vsub.f32 %v924, %v925
        %v927 = vand.u32 %v926, 4294901760
        %928 = vmatprep.mubr.f32.mxu0 %v927
        %v929 = vand.u32 %v811, 4294901760
        %v930 = vsub.f32 %v811, %v929
        %v931 = vand.u32 %v930, 4294901760
        %v932 = vsub.f32 %v930, %v931
        %v933 = vand.u32 %v932, 4294901760
        %934 = vmatmul.mubr.f32.gmra.mrb[0].mxu0 %v933
        %v935 = vpop.f32.mrb[0].mxu0
        %v936 = vadd.f32 0.0, %v935
        %v937 = vpop.f32.mrb[0].mxu0
        %v938 = vand.u32 %v816, 4294901760
        %v939 = vsub.f32 %v816, %v938
        %v940 = vand.u32 %v939, 4294901760
        %v941 = vsub.f32 %v939, %v940
        %v942 = vand.u32 %v941, 4294901760
        %943 = vmatprep.mubr.f32.mxu0 %v942
        %v944 = vand.u32 %v815, 4294901760
        %v945 = vsub.f32 %v815, %v944
        %v946 = vand.u32 %v945, 4294901760
        %v947 = vsub.f32 %v945, %v946
        %v948 = vand.u32 %v947, 4294901760
        %949 = vmatmul.mubr.f32.gmra.mrb[0].mxu0 %v948
        %v950 = vpop.f32.mrb[0].mxu0
        %v951 = vadd.f32 0.0, %v950
        %v952 = vpop.f32.mrb[0].mxu0
        %v953 = vand.u32 %v820, 4294901760
        %v954 = vsub.f32 %v820, %v953
        %v955 = vand.u32 %v954, 4294901760
        %v956 = vsub.f32 %v954, %v955
        %v957 = vand.u32 %v956, 4294901760
        %958 = vmatprep.mubr.f32.mxu0 %v957
        %v959 = vand.u32 %v819, 4294901760
        %v960 = vsub.f32 %v819, %v959
        %v961 = vand.u32 %v960, 4294901760
        %v962 = vsub.f32 %v960, %v961
        %v963 = vand.u32 %v962, 4294901760
        %964 = vmatmul.mubr.f32.gmra.mrb[0].mxu0 %v963
        %v965 = vpop.f32.mrb[0].mxu0
        %v966 = vadd.f32 0.0, %v965
        %v967 = vpop.f32.mrb[0].mxu0
        %v968 = vand.u32 %v824, 4294901760
        %v969 = vsub.f32 %v824, %v968
        %v970 = vand.u32 %v969, 4294901760
        %v971 = vsub.f32 %v969, %v970
        %v972 = vand.u32 %v971, 4294901760
        %973 = vmatprep.mubr.f32.mxu0 %v972
        %v974 = vand.u32 %v823, 4294901760
        %v975 = vsub.f32 %v823, %v974
        %v976 = vand.u32 %v975, 4294901760
        %v977 = vsub.f32 %v975, %v976
        %v978 = vand.u32 %v977, 4294901760
        %979 = vmatmul.mubr.f32.gmra.mrb[0].mxu0 %v978
        %v980 = vpop.f32.mrb[0].mxu0
        %v981 = vadd.f32 0.0, %v980
        %v982 = vpop.f32.mrb[0].mxu0
        %983 = vdwg.mxu0
        %984 = vmatprep.subr.mxu0 0.0
        %v985 = vand.u32 %v747, 4294901760
        %v986 = vsub.f32 %v747, %v985
        %v987 = vand.u32 %v986, 4294901760
        %v988 = vsub.f32 %v986, %v987
        %v989 = vand.u32 %v988, 4294901760
        %990 = vmatpush1.msra.mxu0 %v989
        %991 = vmatprep.subr.mxu0 0.0
        %v992 = vand.u32 %v748, 4294901760
        %v993 = vsub.f32 %v748, %v992
        %v994 = vand.u32 %v993, 4294901760
        %v995 = vsub.f32 %v993, %v994
        %v996 = vand.u32 %v995, 4294901760
        %997 = vmatpush1.msra.mxu0 %v996
        %998 = vmatprep.subr.mxu0 0.0
        %v999 = vand.u32 %v749, 4294901760
        %v1000 = vsub.f32 %v749, %v999
        %v1001 = vand.u32 %v1000, 4294901760
        %v1002 = vsub.f32 %v1000, %v1001
        %v1003 = vand.u32 %v1002, 4294901760
        %1004 = vmatpush1.msra.mxu0 %v1003
        %1005 = vmatprep.subr.mxu0 0.0
        %v1006 = vand.u32 %v750, 4294901760
        %v1007 = vsub.f32 %v750, %v1006
        %v1008 = vand.u32 %v1007, 4294901760
        %v1009 = vsub.f32 %v1007, %v1008
        %v1010 = vand.u32 %v1009, 4294901760
        %1011 = vmatpush1.msra.mxu0 %v1010
        %1012 = vmatprep.subr.mxu0 0.0
        %v1013 = vand.u32 %v751, 4294901760
        %v1014 = vsub.f32 %v751, %v1013
        %v1015 = vand.u32 %v1014, 4294901760
        %v1016 = vsub.f32 %v1014, %v1015
        %v1017 = vand.u32 %v1016, 4294901760
        %1018 = vmatpush1.msra.mxu0 %v1017
        %1019 = vmatprep.subr.mxu0 0.0
        %v1020 = vand.u32 %v752, 4294901760
        %v1021 = vsub.f32 %v752, %v1020
        %v1022 = vand.u32 %v1021, 4294901760
        %v1023 = vsub.f32 %v1021, %v1022
        %v1024 = vand.u32 %v1023, 4294901760
        %1025 = vmatpush1.msra.mxu0 %v1024
        %1026 = vmatprep.subr.mxu0 0.0
        %v1027 = vand.u32 %v753, 4294901760
        %v1028 = vsub.f32 %v753, %v1027
        %v1029 = vand.u32 %v1028, 4294901760
        %v1030 = vsub.f32 %v1028, %v1029
        %v1031 = vand.u32 %v1030, 4294901760
        %1032 = vmatpush1.msra.mxu0 %v1031
        %1033 = vmatprep.subr.mxu0 0.0
        %v1034 = vand.u32 %v754, 4294901760
        %v1035 = vsub.f32 %v754, %v1034
        %v1036 = vand.u32 %v1035, 4294901760
        %v1037 = vsub.f32 %v1035, %v1036
        %v1038 = vand.u32 %v1037, 4294901760
        %1039 = vmatpush1.msra.mxu0 %v1038
        %1040 = vmatprep.subr.mxu0 0.0
        %v1041 = vand.u32 %v755, 4294901760
        %v1042 = vsub.f32 %v755, %v1041
        %v1043 = vand.u32 %v1042, 4294901760
        %v1044 = vsub.f32 %v1042, %v1043
        %v1045 = vand.u32 %v1044, 4294901760
        %1046 = vmatpush1.msra.mxu0 %v1045
        %1047 = vmatprep.subr.mxu0 0.0
        %v1048 = vand.u32 %v756, 4294901760
        %v1049 = vsub.f32 %v756, %v1048
        %v1050 = vand.u32 %v1049, 4294901760
        %v1051 = vsub.f32 %v1049, %v1050
        %v1052 = vand.u32 %v1051, 4294901760
        %1053 = vmatpush1.msra.mxu0 %v1052
        %1054 = vmatprep.subr.mxu0 0.0
        %v1055 = vand.u32 %v757, 4294901760
        %v1056 = vsub.f32 %v757, %v1055
        %v1057 = vand.u32 %v1056, 4294901760
        %v1058 = vsub.f32 %v1056, %v1057
        %v1059 = vand.u32 %v1058, 4294901760
        %1060 = vmatpush1.msra.mxu0 %v1059
        %1061 = vmatprep.subr.mxu0 0.0
        %v1062 = vand.u32 %v758, 4294901760
        %v1063 = vsub.f32 %v758, %v1062
        %v1064 = vand.u32 %v1063, 4294901760
        %v1065 = vsub.f32 %v1063, %v1064
        %v1066 = vand.u32 %v1065, 4294901760
        %1067 = vmatpush1.msra.mxu0 %v1066
        %1068 = vmatprep.subr.mxu0 0.0
        %v1069 = vand.u32 %v759, 4294901760
        %v1070 = vsub.f32 %v759, %v1069
        %v1071 = vand.u32 %v1070, 4294901760
        %v1072 = vsub.f32 %v1070, %v1071
        %v1073 = vand.u32 %v1072, 4294901760
        %1074 = vmatpush1.msra.mxu0 %v1073
        %1075 = vmatprep.subr.mxu0 0.0
        %v1076 = vand.u32 %v760, 4294901760
        %v1077 = vsub.f32 %v760, %v1076
        %v1078 = vand.u32 %v1077, 4294901760
        %v1079 = vsub.f32 %v1077, %v1078
        %v1080 = vand.u32 %v1079, 4294901760
        %1081 = vmatpush1.msra.mxu0 %v1080
        %1082 = vmatprep.subr.mxu0 0.0
        %v1083 = vand.u32 %v761, 4294901760
        %v1084 = vsub.f32 %v761, %v1083
        %v1085 = vand.u32 %v1084, 4294901760
        %v1086 = vsub.f32 %v1084, %v1085
        %v1087 = vand.u32 %v1086, 4294901760
        %1088 = vmatpush1.msra.mxu0 %v1087
        %1089 = vmatprep.subr.mxu0 0.0
        %v1090 = vand.u32 %v762, 4294901760
        %v1091 = vsub.f32 %v762, %v1090
        %v1092 = vand.u32 %v1091, 4294901760
        %v1093 = vsub.f32 %v1091, %v1092
        %v1094 = vand.u32 %v1093, 4294901760
        %1095 = vmatpush1.msra.mxu0 %v1094
        %1096 = vmatprep.subr.mxu0 0.0
        %v1097 = vand.u32 %v763, 4294901760
        %v1098 = vsub.f32 %v763, %v1097
        %v1099 = vand.u32 %v1098, 4294901760
        %v1100 = vsub.f32 %v1098, %v1099
        %v1101 = vand.u32 %v1100, 4294901760
        %1102 = vmatpush1.msra.mxu0 %v1101
        %1103 = vmatprep.subr.mxu0 0.0
        %v1104 = vand.u32 %v764, 4294901760
        %v1105 = vsub.f32 %v764, %v1104
        %v1106 = vand.u32 %v1105, 4294901760
        %v1107 = vsub.f32 %v1105, %v1106
        %v1108 = vand.u32 %v1107, 4294901760
        %1109 = vmatpush1.msra.mxu0 %v1108
        %1110 = vmatprep.subr.mxu0 0.0
        %v1111 = vand.u32 %v765, 4294901760
        %v1112 = vsub.f32 %v765, %v1111
        %v1113 = vand.u32 %v1112, 4294901760
        %v1114 = vsub.f32 %v1112, %v1113
        %v1115 = vand.u32 %v1114, 4294901760
        %1116 = vmatpush1.msra.mxu0 %v1115
        %1117 = vmatprep.subr.mxu0 0.0
        %v1118 = vand.u32 %v766, 4294901760
        %v1119 = vsub.f32 %v766, %v1118
        %v1120 = vand.u32 %v1119, 4294901760
        %v1121 = vsub.f32 %v1119, %v1120
        %v1122 = vand.u32 %v1121, 4294901760
        %1123 = vmatpush1.msra.mxu0 %v1122
        %1124 = vmatprep.subr.mxu0 0.0
        %v1125 = vand.u32 %v767, 4294901760
        %v1126 = vsub.f32 %v767, %v1125
        %v1127 = vand.u32 %v1126, 4294901760
        %v1128 = vsub.f32 %v1126, %v1127
        %v1129 = vand.u32 %v1128, 4294901760
        %1130 = vmatpush1.msra.mxu0 %v1129
        %1131 = vmatprep.subr.mxu0 0.0
        %v1132 = vand.u32 %v768, 4294901760
        %v1133 = vsub.f32 %v768, %v1132
        %v1134 = vand.u32 %v1133, 4294901760
        %v1135 = vsub.f32 %v1133, %v1134
        %v1136 = vand.u32 %v1135, 4294901760
        %1137 = vmatpush1.msra.mxu0 %v1136
        %1138 = vmatprep.subr.mxu0 0.0
        %v1139 = vand.u32 %v769, 4294901760
        %v1140 = vsub.f32 %v769, %v1139
        %v1141 = vand.u32 %v1140, 4294901760
        %v1142 = vsub.f32 %v1140, %v1141
        %v1143 = vand.u32 %v1142, 4294901760
        %1144 = vmatpush1.msra.mxu0 %v1143
        %1145 = vmatprep.subr.mxu0 0.0
        %v1146 = vand.u32 %v770, 4294901760
        %v1147 = vsub.f32 %v770, %v1146
        %v1148 = vand.u32 %v1147, 4294901760
        %v1149 = vsub.f32 %v1147, %v1148
        %v1150 = vand.u32 %v1149, 4294901760
        %1151 = vmatpush1.msra.mxu0 %v1150
        %1152 = vmatprep.subr.mxu0 0.0
        %v1153 = vand.u32 %v771, 4294901760
        %v1154 = vsub.f32 %v771, %v1153
        %v1155 = vand.u32 %v1154, 4294901760
        %v1156 = vsub.f32 %v1154, %v1155
        %v1157 = vand.u32 %v1156, 4294901760
        %1158 = vmatpush1.msra.mxu0 %v1157
        %1159 = vmatprep.subr.mxu0 0.0
        %v1160 = vand.u32 %v772, 4294901760
        %v1161 = vsub.f32 %v772, %v1160
        %v1162 = vand.u32 %v1161, 4294901760
        %v1163 = vsub.f32 %v1161, %v1162
        %v1164 = vand.u32 %v1163, 4294901760
        %1165 = vmatpush1.msra.mxu0 %v1164
        %1166 = vmatprep.subr.mxu0 0.0
        %v1167 = vand.u32 %v773, 4294901760
        %v1168 = vsub.f32 %v773, %v1167
        %v1169 = vand.u32 %v1168, 4294901760
        %v1170 = vsub.f32 %v1168, %v1169
        %v1171 = vand.u32 %v1170, 4294901760
        %1172 = vmatpush1.msra.mxu0 %v1171
        %1173 = vmatprep.subr.mxu0 0.0
        %v1174 = vand.u32 %v774, 4294901760
        %v1175 = vsub.f32 %v774, %v1174
        %v1176 = vand.u32 %v1175, 4294901760
        %v1177 = vsub.f32 %v1175, %v1176
        %v1178 = vand.u32 %v1177, 4294901760
        %1179 = vmatpush1.msra.mxu0 %v1178
        %1180 = vmatprep.subr.mxu0 0.0
        %v1181 = vand.u32 %v775, 4294901760
        %v1182 = vsub.f32 %v775, %v1181
        %v1183 = vand.u32 %v1182, 4294901760
        %v1184 = vsub.f32 %v1182, %v1183
        %v1185 = vand.u32 %v1184, 4294901760
        %1186 = vmatpush1.msra.mxu0 %v1185
        %1187 = vmatprep.subr.mxu0 0.0
        %v1188 = vand.u32 %v776, 4294901760
        %v1189 = vsub.f32 %v776, %v1188
        %v1190 = vand.u32 %v1189, 4294901760
        %v1191 = vsub.f32 %v1189, %v1190
        %v1192 = vand.u32 %v1191, 4294901760
        %1193 = vmatpush1.msra.mxu0 %v1192
        %1194 = vmatprep.subr.mxu0 0.0
        %v1195 = vand.u32 %v777, 4294901760
        %v1196 = vsub.f32 %v777, %v1195
        %v1197 = vand.u32 %v1196, 4294901760
        %v1198 = vsub.f32 %v1196, %v1197
        %v1199 = vand.u32 %v1198, 4294901760
        %1200 = vmatpush1.msra.mxu0 %v1199
        %1201 = vmatprep.subr.mxu0 0.0
        %v1202 = vand.u32 %v778, 4294901760
        %v1203 = vsub.f32 %v778, %v1202
        %v1204 = vand.u32 %v1203, 4294901760
        %v1205 = vsub.f32 %v1203, %v1204
        %v1206 = vand.u32 %v1205, 4294901760
        %1207 = vmatpush1.msra.mxu0 %v1206
        %v1208 = vand.u32 %v812, 4294901760
        %1209 = vmatprep.mubr.f32.mxu0 %v1208
        %v1210 = vand.u32 %v811, 4294901760
        %1211 = vmatmul.mubr.f32.gmra.mrb[0].mxu0 %v1210
        %v1212 = vpop.f32.mrb[0].mxu0
        %v1213 = vadd.f32 %v936, %v1212
        %v1214 = vpop.f32.mrb[0].mxu0
        %v1215 = vand.u32 %v816, 4294901760
        %1216 = vmatprep.mubr.f32.mxu0 %v1215
        %v1217 = vand.u32 %v815, 4294901760
        %1218 = vmatmul.mubr.f32.gmra.mrb[0].mxu0 %v1217
        %v1219 = vpop.f32.mrb[0].mxu0
        %v1220 = vadd.f32 %v951, %v1219
        %v1221 = vpop.f32.mrb[0].mxu0
        %v1222 = vand.u32 %v820, 4294901760
        %1223 = vmatprep.mubr.f32.mxu0 %v1222
        %v1224 = vand.u32 %v819, 4294901760
        %1225 = vmatmul.mubr.f32.gmra.mrb[0].mxu0 %v1224
        %v1226 = vpop.f32.mrb[0].mxu0
        %v1227 = vadd.f32 %v966, %v1226
        %v1228 = vpop.f32.mrb[0].mxu0
        %v1229 = vand.u32 %v824, 4294901760
        %1230 = vmatprep.mubr.f32.mxu0 %v1229
        %v1231 = vand.u32 %v823, 4294901760
        %1232 = vmatmul.mubr.f32.gmra.mrb[0].mxu0 %v1231
        %v1233 = vpop.f32.mrb[0].mxu0
        %v1234 = vadd.f32 %v981, %v1233
        %v1235 = vpop.f32.mrb[0].mxu0
        %1236 = vdwg.mxu0
        %1237 = vmatprep.subr.mxu0 0.0
        %v1238 = vand.u32 %v747, 4294901760
        %v1239 = vsub.f32 %v747, %v1238
        %1240 = vmatpush1.msra.mxu0 %v1239
        %1241 = vmatprep.subr.mxu0 0.0
        %v1242 = vand.u32 %v748, 4294901760
        %v1243 = vsub.f32 %v748, %v1242
        %1244 = vmatpush1.msra.mxu0 %v1243
        %1245 = vmatprep.subr.mxu0 0.0
        %v1246 = vand.u32 %v749, 4294901760
        %v1247 = vsub.f32 %v749, %v1246
        %1248 = vmatpush1.msra.mxu0 %v1247
        %1249 = vmatprep.subr.mxu0 0.0
        %v1250 = vand.u32 %v750, 4294901760
        %v1251 = vsub.f32 %v750, %v1250
        %1252 = vmatpush1.msra.mxu0 %v1251
        %1253 = vmatprep.subr.mxu0 0.0
        %v1254 = vand.u32 %v751, 4294901760
        %v1255 = vsub.f32 %v751, %v1254
        %1256 = vmatpush1.msra.mxu0 %v1255
        %1257 = vmatprep.subr.mxu0 0.0
        %v1258 = vand.u32 %v752, 4294901760
        %v1259 = vsub.f32 %v752, %v1258
        %1260 = vmatpush1.msra.mxu0 %v1259
        %1261 = vmatprep.subr.mxu0 0.0
        %v1262 = vand.u32 %v753, 4294901760
        %v1263 = vsub.f32 %v753, %v1262
        %1264 = vmatpush1.msra.mxu0 %v1263
        %1265 = vmatprep.subr.mxu0 0.0
        %v1266 = vand.u32 %v754, 4294901760
        %v1267 = vsub.f32 %v754, %v1266
        %1268 = vmatpush1.msra.mxu0 %v1267
        %1269 = vmatprep.subr.mxu0 0.0
        %v1270 = vand.u32 %v755, 4294901760
        %v1271 = vsub.f32 %v755, %v1270
        %1272 = vmatpush1.msra.mxu0 %v1271
        %1273 = vmatprep.subr.mxu0 0.0
        %v1274 = vand.u32 %v756, 4294901760
        %v1275 = vsub.f32 %v756, %v1274
        %1276 = vmatpush1.msra.mxu0 %v1275
        %1277 = vmatprep.subr.mxu0 0.0
        %v1278 = vand.u32 %v757, 4294901760
        %v1279 = vsub.f32 %v757, %v1278
        %1280 = vmatpush1.msra.mxu0 %v1279
        %1281 = vmatprep.subr.mxu0 0.0
        %v1282 = vand.u32 %v758, 4294901760
        %v1283 = vsub.f32 %v758, %v1282
        %1284 = vmatpush1.msra.mxu0 %v1283
        %1285 = vmatprep.subr.mxu0 0.0
        %v1286 = vand.u32 %v759, 4294901760
        %v1287 = vsub.f32 %v759, %v1286
        %1288 = vmatpush1.msra.mxu0 %v1287
        %1289 = vmatprep.subr.mxu0 0.0
        %v1290 = vand.u32 %v760, 4294901760
        %v1291 = vsub.f32 %v760, %v1290
        %1292 = vmatpush1.msra.mxu0 %v1291
        %1293 = vmatprep.subr.mxu0 0.0
        %v1294 = vand.u32 %v761, 4294901760
        %v1295 = vsub.f32 %v761, %v1294
        %1296 = vmatpush1.msra.mxu0 %v1295
        %1297 = vmatprep.subr.mxu0 0.0
        %v1298 = vand.u32 %v762, 4294901760
        %v1299 = vsub.f32 %v762, %v1298
        %1300 = vmatpush1.msra.mxu0 %v1299
        %1301 = vmatprep.subr.mxu0 0.0
        %v1302 = vand.u32 %v763, 4294901760
        %v1303 = vsub.f32 %v763, %v1302
        %1304 = vmatpush1.msra.mxu0 %v1303
        %1305 = vmatprep.subr.mxu0 0.0
        %v1306 = vand.u32 %v764, 4294901760
        %v1307 = vsub.f32 %v764, %v1306
        %1308 = vmatpush1.msra.mxu0 %v1307
        %1309 = vmatprep.subr.mxu0 0.0
        %v1310 = vand.u32 %v765, 4294901760
        %v1311 = vsub.f32 %v765, %v1310
        %1312 = vmatpush1.msra.mxu0 %v1311
        %1313 = vmatprep.subr.mxu0 0.0
        %v1314 = vand.u32 %v766, 4294901760
        %v1315 = vsub.f32 %v766, %v1314
        %1316 = vmatpush1.msra.mxu0 %v1315
        %1317 = vmatprep.subr.mxu0 0.0
        %v1318 = vand.u32 %v767, 4294901760
        %v1319 = vsub.f32 %v767, %v1318
        %1320 = vmatpush1.msra.mxu0 %v1319
        %1321 = vmatprep.subr.mxu0 0.0
        %v1322 = vand.u32 %v768, 4294901760
        %v1323 = vsub.f32 %v768, %v1322
        %1324 = vmatpush1.msra.mxu0 %v1323
        %1325 = vmatprep.subr.mxu0 0.0
        %v1326 = vand.u32 %v769, 4294901760
        %v1327 = vsub.f32 %v769, %v1326
        %1328 = vmatpush1.msra.mxu0 %v1327
        %1329 = vmatprep.subr.mxu0 0.0
        %v1330 = vand.u32 %v770, 4294901760
        %v1331 = vsub.f32 %v770, %v1330
        %1332 = vmatpush1.msra.mxu0 %v1331
        %1333 = vmatprep.subr.mxu0 0.0
        %v1334 = vand.u32 %v771, 4294901760
        %v1335 = vsub.f32 %v771, %v1334
        %1336 = vmatpush1.msra.mxu0 %v1335
        %1337 = vmatprep.subr.mxu0 0.0
        %v1338 = vand.u32 %v772, 4294901760
        %v1339 = vsub.f32 %v772, %v1338
        %1340 = vmatpush1.msra.mxu0 %v1339
        %1341 = vmatprep.subr.mxu0 0.0
        %v1342 = vand.u32 %v773, 4294901760
        %v1343 = vsub.f32 %v773, %v1342
        %1344 = vmatpush1.msra.mxu0 %v1343
        %1345 = vmatprep.subr.mxu0 0.0
        %v1346 = vand.u32 %v774, 4294901760
        %v1347 = vsub.f32 %v774, %v1346
        %1348 = vmatpush1.msra.mxu0 %v1347
        %1349 = vmatprep.subr.mxu0 0.0
        %v1350 = vand.u32 %v775, 4294901760
        %v1351 = vsub.f32 %v775, %v1350
        %1352 = vmatpush1.msra.mxu0 %v1351
        %1353 = vmatprep.subr.mxu0 0.0
        %v1354 = vand.u32 %v776, 4294901760
        %v1355 = vsub.f32 %v776, %v1354
        %1356 = vmatpush1.msra.mxu0 %v1355
        %1357 = vmatprep.subr.mxu0 0.0
        %v1358 = vand.u32 %v777, 4294901760
        %v1359 = vsub.f32 %v777, %v1358
        %1360 = vmatpush1.msra.mxu0 %v1359
        %1361 = vmatprep.subr.mxu0 0.0
        %v1362 = vand.u32 %v778, 4294901760
        %v1363 = vsub.f32 %v778, %v1362
        %1364 = vmatpush1.msra.mxu0 %v1363
        %v1365 = vand.u32 %v812, 4294901760
        %v1366 = vsub.f32 %v812, %v1365
        %1367 = vmatprep.mubr.f32.mxu0 %v1366
        %v1368 = vand.u32 %v811, 4294901760
        %v1369 = vsub.f32 %v811, %v1368
        %1370 = vmatmul.mubr.f32.gmra.mrb[0].mxu0 %v1369
        %v1371 = vpop.f32.mrb[0].mxu0
        %v1372 = vadd.f32 %v1213, %v1371
        %v1373 = vpop.f32.mrb[0].mxu0
        %v1374 = vand.u32 %v816, 4294901760
        %v1375 = vsub.f32 %v816, %v1374
        %1376 = vmatprep.mubr.f32.mxu0 %v1375
        %v1377 = vand.u32 %v815, 4294901760
        %v1378 = vsub.f32 %v815, %v1377
        %1379 = vmatmul.mubr.f32.gmra.mrb[0].mxu0 %v1378
        %v1380 = vpop.f32.mrb[0].mxu0
        %v1381 = vadd.f32 %v1220, %v1380
        %v1382 = vpop.f32.mrb[0].mxu0
        %v1383 = vand.u32 %v820, 4294901760
        %v1384 = vsub.f32 %v820, %v1383
        %1385 = vmatprep.mubr.f32.mxu0 %v1384
        %v1386 = vand.u32 %v819, 4294901760
        %v1387 = vsub.f32 %v819, %v1386
        %1388 = vmatmul.mubr.f32.gmra.mrb[0].mxu0 %v1387
        %v1389 = vpop.f32.mrb[0].mxu0
        %v1390 = vadd.f32 %v1227, %v1389
        %v1391 = vpop.f32.mrb[0].mxu0
        %v1392 = vand.u32 %v824, 4294901760
        %v1393 = vsub.f32 %v824, %v1392
        %1394 = vmatprep.mubr.f32.mxu0 %v1393
        %v1395 = vand.u32 %v823, 4294901760
        %v1396 = vsub.f32 %v823, %v1395
        %1397 = vmatmul.mubr.f32.gmra.mrb[0].mxu0 %v1396
        %v1398 = vpop.f32.mrb[0].mxu0
        %v1399 = vadd.f32 %v1234, %v1398
        %v1400 = vpop.f32.mrb[0].mxu0
        %1401 = vdwg.mxu0
        %1402 = vmatprep.subr.mxu0 0.0
        %v1403 = vand.u32 %v747, 4294901760
        %1404 = vmatpush1.msra.mxu0 %v1403
        %1405 = vmatprep.subr.mxu0 0.0
        %v1406 = vand.u32 %v748, 4294901760
        %1407 = vmatpush1.msra.mxu0 %v1406
        %1408 = vmatprep.subr.mxu0 0.0
        %v1409 = vand.u32 %v749, 4294901760
        %1410 = vmatpush1.msra.mxu0 %v1409
        %1411 = vmatprep.subr.mxu0 0.0
        %v1412 = vand.u32 %v750, 4294901760
        %1413 = vmatpush1.msra.mxu0 %v1412
        %1414 = vmatprep.subr.mxu0 0.0
        %v1415 = vand.u32 %v751, 4294901760
        %1416 = vmatpush1.msra.mxu0 %v1415
        %1417 = vmatprep.subr.mxu0 0.0
        %v1418 = vand.u32 %v752, 4294901760
        %1419 = vmatpush1.msra.mxu0 %v1418
        %1420 = vmatprep.subr.mxu0 0.0
        %v1421 = vand.u32 %v753, 4294901760
        %1422 = vmatpush1.msra.mxu0 %v1421
        %1423 = vmatprep.subr.mxu0 0.0
        %v1424 = vand.u32 %v754, 4294901760
        %1425 = vmatpush1.msra.mxu0 %v1424
        %1426 = vmatprep.subr.mxu0 0.0
        %v1427 = vand.u32 %v755, 4294901760
        %1428 = vmatpush1.msra.mxu0 %v1427
        %1429 = vmatprep.subr.mxu0 0.0
        %v1430 = vand.u32 %v756, 4294901760
        %1431 = vmatpush1.msra.mxu0 %v1430
        %1432 = vmatprep.subr.mxu0 0.0
        %v1433 = vand.u32 %v757, 4294901760
        %1434 = vmatpush1.msra.mxu0 %v1433
        %1435 = vmatprep.subr.mxu0 0.0
        %v1436 = vand.u32 %v758, 4294901760
        %1437 = vmatpush1.msra.mxu0 %v1436
        %1438 = vmatprep.subr.mxu0 0.0
        %v1439 = vand.u32 %v759, 4294901760
        %1440 = vmatpush1.msra.mxu0 %v1439
        %1441 = vmatprep.subr.mxu0 0.0
        %v1442 = vand.u32 %v760, 4294901760
        %1443 = vmatpush1.msra.mxu0 %v1442
        %1444 = vmatprep.subr.mxu0 0.0
        %v1445 = vand.u32 %v761, 4294901760
        %1446 = vmatpush1.msra.mxu0 %v1445
        %1447 = vmatprep.subr.mxu0 0.0
        %v1448 = vand.u32 %v762, 4294901760
        %1449 = vmatpush1.msra.mxu0 %v1448
        %1450 = vmatprep.subr.mxu0 0.0
        %v1451 = vand.u32 %v763, 4294901760
        %1452 = vmatpush1.msra.mxu0 %v1451
        %1453 = vmatprep.subr.mxu0 0.0
        %v1454 = vand.u32 %v764, 4294901760
        %1455 = vmatpush1.msra.mxu0 %v1454
        %1456 = vmatprep.subr.mxu0 0.0
        %v1457 = vand.u32 %v765, 4294901760
        %1458 = vmatpush1.msra.mxu0 %v1457
        %1459 = vmatprep.subr.mxu0 0.0
        %v1460 = vand.u32 %v766, 4294901760
        %1461 = vmatpush1.msra.mxu0 %v1460
        %1462 = vmatprep.subr.mxu0 0.0
        %v1463 = vand.u32 %v767, 4294901760
        %1464 = vmatpush1.msra.mxu0 %v1463
        %1465 = vmatprep.subr.mxu0 0.0
        %v1466 = vand.u32 %v768, 4294901760
        %1467 = vmatpush1.msra.mxu0 %v1466
        %1468 = vmatprep.subr.mxu0 0.0
        %v1469 = vand.u32 %v769, 4294901760
        %1470 = vmatpush1.msra.mxu0 %v1469
        %1471 = vmatprep.subr.mxu0 0.0
        %v1472 = vand.u32 %v770, 4294901760
        %1473 = vmatpush1.msra.mxu0 %v1472
        %1474 = vmatprep.subr.mxu0 0.0
        %v1475 = vand.u32 %v771, 4294901760
        %1476 = vmatpush1.msra.mxu0 %v1475
        %1477 = vmatprep.subr.mxu0 0.0
        %v1478 = vand.u32 %v772, 4294901760
        %1479 = vmatpush1.msra.mxu0 %v1478
        %1480 = vmatprep.subr.mxu0 0.0
        %v1481 = vand.u32 %v773, 4294901760
        %1482 = vmatpush1.msra.mxu0 %v1481
        %1483 = vmatprep.subr.mxu0 0.0
        %v1484 = vand.u32 %v774, 4294901760
        %1485 = vmatpush1.msra.mxu0 %v1484
        %1486 = vmatprep.subr.mxu0 0.0
        %v1487 = vand.u32 %v775, 4294901760
        %1488 = vmatpush1.msra.mxu0 %v1487
        %1489 = vmatprep.subr.mxu0 0.0
        %v1490 = vand.u32 %v776, 4294901760
        %1491 = vmatpush1.msra.mxu0 %v1490
        %1492 = vmatprep.subr.mxu0 0.0
        %v1493 = vand.u32 %v777, 4294901760
        %1494 = vmatpush1.msra.mxu0 %v1493
        %1495 = vmatprep.subr.mxu0 0.0
        %v1496 = vand.u32 %v778, 4294901760
        %1497 = vmatpush1.msra.mxu0 %v1496
        %v1498 = vand.u32 %v812, 4294901760
        %v1499 = vsub.f32 %v812, %v1498
        %v1500 = vand.u32 %v1499, 4294901760
        %1501 = vmatprep.mubr.f32.mxu0 %v1500
        %v1502 = vand.u32 %v811, 4294901760
        %v1503 = vsub.f32 %v811, %v1502
        %v1504 = vand.u32 %v1503, 4294901760
        %1505 = vmatmul.mubr.f32.gmra.mrb[0].mxu0 %v1504
        %v1506 = vpop.f32.mrb[0].mxu0
        %v1507 = vadd.f32 %v1372, %v1506
        %v1508 = vpop.f32.mrb[0].mxu0
        %v1509 = vand.u32 %v816, 4294901760
        %v1510 = vsub.f32 %v816, %v1509
        %v1511 = vand.u32 %v1510, 4294901760
        %1512 = vmatprep.mubr.f32.mxu0 %v1511
        %v1513 = vand.u32 %v815, 4294901760
        %v1514 = vsub.f32 %v815, %v1513
        %v1515 = vand.u32 %v1514, 4294901760
        %1516 = vmatmul.mubr.f32.gmra.mrb[0].mxu0 %v1515
        %v1517 = vpop.f32.mrb[0].mxu0
        %v1518 = vadd.f32 %v1381, %v1517
        %v1519 = vpop.f32.mrb[0].mxu0
        %v1520 = vand.u32 %v820, 4294901760
        %v1521 = vsub.f32 %v820, %v1520
        %v1522 = vand.u32 %v1521, 4294901760
        %1523 = vmatprep.mubr.f32.mxu0 %v1522
        %v1524 = vand.u32 %v819, 4294901760
        %v1525 = vsub.f32 %v819, %v1524
        %v1526 = vand.u32 %v1525, 4294901760
        %1527 = vmatmul.mubr.f32.gmra.mrb[0].mxu0 %v1526
        %v1528 = vpop.f32.mrb[0].mxu0
        %v1529 = vadd.f32 %v1390, %v1528
        %v1530 = vpop.f32.mrb[0].mxu0
        %v1531 = vand.u32 %v824, 4294901760
        %v1532 = vsub.f32 %v824, %v1531
        %v1533 = vand.u32 %v1532, 4294901760
        %1534 = vmatprep.mubr.f32.mxu0 %v1533
        %v1535 = vand.u32 %v823, 4294901760
        %v1536 = vsub.f32 %v823, %v1535
        %v1537 = vand.u32 %v1536, 4294901760
        %1538 = vmatmul.mubr.f32.gmra.mrb[0].mxu0 %v1537
        %v1539 = vpop.f32.mrb[0].mxu0
        %v1540 = vadd.f32 %v1399, %v1539
        %v1541 = vpop.f32.mrb[0].mxu0
        %1542 = vdwg.mxu0
        %1543 = vmatprep.subr.mxu0 0.0
        %v1544 = vand.u32 %v747, 4294901760
        %v1545 = vsub.f32 %v747, %v1544
        %v1546 = vand.u32 %v1545, 4294901760
        %1547 = vmatpush1.msra.mxu0 %v1546
        %1548 = vmatprep.subr.mxu0 0.0
        %v1549 = vand.u32 %v748, 4294901760
        %v1550 = vsub.f32 %v748, %v1549
        %v1551 = vand.u32 %v1550, 4294901760
        %1552 = vmatpush1.msra.mxu0 %v1551
        %1553 = vmatprep.subr.mxu0 0.0
        %v1554 = vand.u32 %v749, 4294901760
        %v1555 = vsub.f32 %v749, %v1554
        %v1556 = vand.u32 %v1555, 4294901760
        %1557 = vmatpush1.msra.mxu0 %v1556
        %1558 = vmatprep.subr.mxu0 0.0
        %v1559 = vand.u32 %v750, 4294901760
        %v1560 = vsub.f32 %v750, %v1559
        %v1561 = vand.u32 %v1560, 4294901760
        %1562 = vmatpush1.msra.mxu0 %v1561
        %1563 = vmatprep.subr.mxu0 0.0
        %v1564 = vand.u32 %v751, 4294901760
        %v1565 = vsub.f32 %v751, %v1564
        %v1566 = vand.u32 %v1565, 4294901760
        %1567 = vmatpush1.msra.mxu0 %v1566
        %1568 = vmatprep.subr.mxu0 0.0
        %v1569 = vand.u32 %v752, 4294901760
        %v1570 = vsub.f32 %v752, %v1569
        %v1571 = vand.u32 %v1570, 4294901760
        %1572 = vmatpush1.msra.mxu0 %v1571
        %1573 = vmatprep.subr.mxu0 0.0
        %v1574 = vand.u32 %v753, 4294901760
        %v1575 = vsub.f32 %v753, %v1574
        %v1576 = vand.u32 %v1575, 4294901760
        %1577 = vmatpush1.msra.mxu0 %v1576
        %1578 = vmatprep.subr.mxu0 0.0
        %v1579 = vand.u32 %v754, 4294901760
        %v1580 = vsub.f32 %v754, %v1579
        %v1581 = vand.u32 %v1580, 4294901760
        %1582 = vmatpush1.msra.mxu0 %v1581
        %1583 = vmatprep.subr.mxu0 0.0
        %v1584 = vand.u32 %v755, 4294901760
        %v1585 = vsub.f32 %v755, %v1584
        %v1586 = vand.u32 %v1585, 4294901760
        %1587 = vmatpush1.msra.mxu0 %v1586
        %1588 = vmatprep.subr.mxu0 0.0
        %v1589 = vand.u32 %v756, 4294901760
        %v1590 = vsub.f32 %v756, %v1589
        %v1591 = vand.u32 %v1590, 4294901760
        %1592 = vmatpush1.msra.mxu0 %v1591
        %1593 = vmatprep.subr.mxu0 0.0
        %v1594 = vand.u32 %v757, 4294901760
        %v1595 = vsub.f32 %v757, %v1594
        %v1596 = vand.u32 %v1595, 4294901760
        %1597 = vmatpush1.msra.mxu0 %v1596
        %1598 = vmatprep.subr.mxu0 0.0
        %v1599 = vand.u32 %v758, 4294901760
        %v1600 = vsub.f32 %v758, %v1599
        %v1601 = vand.u32 %v1600, 4294901760
        %1602 = vmatpush1.msra.mxu0 %v1601
        %1603 = vmatprep.subr.mxu0 0.0
        %v1604 = vand.u32 %v759, 4294901760
        %v1605 = vsub.f32 %v759, %v1604
        %v1606 = vand.u32 %v1605, 4294901760
        %1607 = vmatpush1.msra.mxu0 %v1606
        %1608 = vmatprep.subr.mxu0 0.0
        %v1609 = vand.u32 %v760, 4294901760
        %v1610 = vsub.f32 %v760, %v1609
        %v1611 = vand.u32 %v1610, 4294901760
        %1612 = vmatpush1.msra.mxu0 %v1611
        %1613 = vmatprep.subr.mxu0 0.0
        %v1614 = vand.u32 %v761, 4294901760
        %v1615 = vsub.f32 %v761, %v1614
        %v1616 = vand.u32 %v1615, 4294901760
        %1617 = vmatpush1.msra.mxu0 %v1616
        %1618 = vmatprep.subr.mxu0 0.0
        %v1619 = vand.u32 %v762, 4294901760
        %v1620 = vsub.f32 %v762, %v1619
        %v1621 = vand.u32 %v1620, 4294901760
        %1622 = vmatpush1.msra.mxu0 %v1621
        %1623 = vmatprep.subr.mxu0 0.0
        %v1624 = vand.u32 %v763, 4294901760
        %v1625 = vsub.f32 %v763, %v1624
        %v1626 = vand.u32 %v1625, 4294901760
        %1627 = vmatpush1.msra.mxu0 %v1626
        %1628 = vmatprep.subr.mxu0 0.0
        %v1629 = vand.u32 %v764, 4294901760
        %v1630 = vsub.f32 %v764, %v1629
        %v1631 = vand.u32 %v1630, 4294901760
        %1632 = vmatpush1.msra.mxu0 %v1631
        %1633 = vmatprep.subr.mxu0 0.0
        %v1634 = vand.u32 %v765, 4294901760
        %v1635 = vsub.f32 %v765, %v1634
        %v1636 = vand.u32 %v1635, 4294901760
        %1637 = vmatpush1.msra.mxu0 %v1636
        %1638 = vmatprep.subr.mxu0 0.0
        %v1639 = vand.u32 %v766, 4294901760
        %v1640 = vsub.f32 %v766, %v1639
        %v1641 = vand.u32 %v1640, 4294901760
        %1642 = vmatpush1.msra.mxu0 %v1641
        %1643 = vmatprep.subr.mxu0 0.0
        %v1644 = vand.u32 %v767, 4294901760
        %v1645 = vsub.f32 %v767, %v1644
        %v1646 = vand.u32 %v1645, 4294901760
        %1647 = vmatpush1.msra.mxu0 %v1646
        %1648 = vmatprep.subr.mxu0 0.0
        %v1649 = vand.u32 %v768, 4294901760
        %v1650 = vsub.f32 %v768, %v1649
        %v1651 = vand.u32 %v1650, 4294901760
        %1652 = vmatpush1.msra.mxu0 %v1651
        %1653 = vmatprep.subr.mxu0 0.0
        %v1654 = vand.u32 %v769, 4294901760
        %v1655 = vsub.f32 %v769, %v1654
        %v1656 = vand.u32 %v1655, 4294901760
        %1657 = vmatpush1.msra.mxu0 %v1656
        %1658 = vmatprep.subr.mxu0 0.0
        %v1659 = vand.u32 %v770, 4294901760
        %v1660 = vsub.f32 %v770, %v1659
        %v1661 = vand.u32 %v1660, 4294901760
        %1662 = vmatpush1.msra.mxu0 %v1661
        %1663 = vmatprep.subr.mxu0 0.0
        %v1664 = vand.u32 %v771, 4294901760
        %v1665 = vsub.f32 %v771, %v1664
        %v1666 = vand.u32 %v1665, 4294901760
        %1667 = vmatpush1.msra.mxu0 %v1666
        %1668 = vmatprep.subr.mxu0 0.0
        %v1669 = vand.u32 %v772, 4294901760
        %v1670 = vsub.f32 %v772, %v1669
        %v1671 = vand.u32 %v1670, 4294901760
        %1672 = vmatpush1.msra.mxu0 %v1671
        %1673 = vmatprep.subr.mxu0 0.0
        %v1674 = vand.u32 %v773, 4294901760
        %v1675 = vsub.f32 %v773, %v1674
        %v1676 = vand.u32 %v1675, 4294901760
        %1677 = vmatpush1.msra.mxu0 %v1676
        %1678 = vmatprep.subr.mxu0 0.0
        %v1679 = vand.u32 %v774, 4294901760
        %v1680 = vsub.f32 %v774, %v1679
        %v1681 = vand.u32 %v1680, 4294901760
        %1682 = vmatpush1.msra.mxu0 %v1681
        %1683 = vmatprep.subr.mxu0 0.0
        %v1684 = vand.u32 %v775, 4294901760
        %v1685 = vsub.f32 %v775, %v1684
        %v1686 = vand.u32 %v1685, 4294901760
        %1687 = vmatpush1.msra.mxu0 %v1686
        %1688 = vmatprep.subr.mxu0 0.0
        %v1689 = vand.u32 %v776, 4294901760
        %v1690 = vsub.f32 %v776, %v1689
        %v1691 = vand.u32 %v1690, 4294901760
        %1692 = vmatpush1.msra.mxu0 %v1691
        %1693 = vmatprep.subr.mxu0 0.0
        %v1694 = vand.u32 %v777, 4294901760
        %v1695 = vsub.f32 %v777, %v1694
        %v1696 = vand.u32 %v1695, 4294901760
        %1697 = vmatpush1.msra.mxu0 %v1696
        %1698 = vmatprep.subr.mxu0 0.0
        %v1699 = vand.u32 %v778, 4294901760
        %v1700 = vsub.f32 %v778, %v1699
        %v1701 = vand.u32 %v1700, 4294901760
        %1702 = vmatpush1.msra.mxu0 %v1701
        %v1703 = vand.u32 %v812, 4294901760
        %1704 = vmatprep.mubr.f32.mxu0 %v1703
        %v1705 = vand.u32 %v811, 4294901760
        %1706 = vmatmul.mubr.f32.gmra.mrb[0].mxu0 %v1705
        %v1707 = vpop.f32.mrb[0].mxu0
        %v1708 = vadd.f32 %v1507, %v1707
        %v1709 = vpop.f32.mrb[0].mxu0
        %v1710 = vand.u32 %v816, 4294901760
        %1711 = vmatprep.mubr.f32.mxu0 %v1710
        %v1712 = vand.u32 %v815, 4294901760
        %1713 = vmatmul.mubr.f32.gmra.mrb[0].mxu0 %v1712
        %v1714 = vpop.f32.mrb[0].mxu0
        %v1715 = vadd.f32 %v1518, %v1714
        %v1716 = vpop.f32.mrb[0].mxu0
        %v1717 = vand.u32 %v820, 4294901760
        %1718 = vmatprep.mubr.f32.mxu0 %v1717
        %v1719 = vand.u32 %v819, 4294901760
        %1720 = vmatmul.mubr.f32.gmra.mrb[0].mxu0 %v1719
        %v1721 = vpop.f32.mrb[0].mxu0
        %v1722 = vadd.f32 %v1529, %v1721
        %v1723 = vpop.f32.mrb[0].mxu0
        %v1724 = vand.u32 %v824, 4294901760
        %1725 = vmatprep.mubr.f32.mxu0 %v1724
        %v1726 = vand.u32 %v823, 4294901760
        %1727 = vmatmul.mubr.f32.gmra.mrb[0].mxu0 %v1726
        %v1728 = vpop.f32.mrb[0].mxu0
        %v1729 = vadd.f32 %v1540, %v1728
        %v1730 = vpop.f32.mrb[0].mxu0
        %1731 = vdwg.mxu0
        %1732 = vmatprep.subr.mxu0 0.0
        %v1733 = vand.u32 %v747, 4294901760
        %1734 = vmatpush1.msra.mxu0 %v1733
        %1735 = vmatprep.subr.mxu0 0.0
        %v1736 = vand.u32 %v748, 4294901760
        %1737 = vmatpush1.msra.mxu0 %v1736
        %1738 = vmatprep.subr.mxu0 0.0
        %v1739 = vand.u32 %v749, 4294901760
        %1740 = vmatpush1.msra.mxu0 %v1739
        %1741 = vmatprep.subr.mxu0 0.0
        %v1742 = vand.u32 %v750, 4294901760
        %1743 = vmatpush1.msra.mxu0 %v1742
        %1744 = vmatprep.subr.mxu0 0.0
        %v1745 = vand.u32 %v751, 4294901760
        %1746 = vmatpush1.msra.mxu0 %v1745
        %1747 = vmatprep.subr.mxu0 0.0
        %v1748 = vand.u32 %v752, 4294901760
        %1749 = vmatpush1.msra.mxu0 %v1748
        %1750 = vmatprep.subr.mxu0 0.0
        %v1751 = vand.u32 %v753, 4294901760
        %1752 = vmatpush1.msra.mxu0 %v1751
        %1753 = vmatprep.subr.mxu0 0.0
        %v1754 = vand.u32 %v754, 4294901760
        %1755 = vmatpush1.msra.mxu0 %v1754
        %1756 = vmatprep.subr.mxu0 0.0
        %v1757 = vand.u32 %v755, 4294901760
        %1758 = vmatpush1.msra.mxu0 %v1757
        %1759 = vmatprep.subr.mxu0 0.0
        %v1760 = vand.u32 %v756, 4294901760
        %1761 = vmatpush1.msra.mxu0 %v1760
        %1762 = vmatprep.subr.mxu0 0.0
        %v1763 = vand.u32 %v757, 4294901760
        %1764 = vmatpush1.msra.mxu0 %v1763
        %1765 = vmatprep.subr.mxu0 0.0
        %v1766 = vand.u32 %v758, 4294901760
        %1767 = vmatpush1.msra.mxu0 %v1766
        %1768 = vmatprep.subr.mxu0 0.0
        %v1769 = vand.u32 %v759, 4294901760
        %1770 = vmatpush1.msra.mxu0 %v1769
        %1771 = vmatprep.subr.mxu0 0.0
        %v1772 = vand.u32 %v760, 4294901760
        %1773 = vmatpush1.msra.mxu0 %v1772
        %1774 = vmatprep.subr.mxu0 0.0
        %v1775 = vand.u32 %v761, 4294901760
        %1776 = vmatpush1.msra.mxu0 %v1775
        %1777 = vmatprep.subr.mxu0 0.0
        %v1778 = vand.u32 %v762, 4294901760
        %1779 = vmatpush1.msra.mxu0 %v1778
        %1780 = vmatprep.subr.mxu0 0.0
        %v1781 = vand.u32 %v763, 4294901760
        %1782 = vmatpush1.msra.mxu0 %v1781
        %1783 = vmatprep.subr.mxu0 0.0
        %v1784 = vand.u32 %v764, 4294901760
        %1785 = vmatpush1.msra.mxu0 %v1784
        %1786 = vmatprep.subr.mxu0 0.0
        %v1787 = vand.u32 %v765, 4294901760
        %1788 = vmatpush1.msra.mxu0 %v1787
        %1789 = vmatprep.subr.mxu0 0.0
        %v1790 = vand.u32 %v766, 4294901760
        %1791 = vmatpush1.msra.mxu0 %v1790
        %1792 = vmatprep.subr.mxu0 0.0
        %v1793 = vand.u32 %v767, 4294901760
        %1794 = vmatpush1.msra.mxu0 %v1793
        %1795 = vmatprep.subr.mxu0 0.0
        %v1796 = vand.u32 %v768, 4294901760
        %1797 = vmatpush1.msra.mxu0 %v1796
        %1798 = vmatprep.subr.mxu0 0.0
        %v1799 = vand.u32 %v769, 4294901760
        %1800 = vmatpush1.msra.mxu0 %v1799
        %1801 = vmatprep.subr.mxu0 0.0
        %v1802 = vand.u32 %v770, 4294901760
        %1803 = vmatpush1.msra.mxu0 %v1802
        %1804 = vmatprep.subr.mxu0 0.0
        %v1805 = vand.u32 %v771, 4294901760
        %1806 = vmatpush1.msra.mxu0 %v1805
        %1807 = vmatprep.subr.mxu0 0.0
        %v1808 = vand.u32 %v772, 4294901760
        %1809 = vmatpush1.msra.mxu0 %v1808
        %1810 = vmatprep.subr.mxu0 0.0
        %v1811 = vand.u32 %v773, 4294901760
        %1812 = vmatpush1.msra.mxu0 %v1811
        %1813 = vmatprep.subr.mxu0 0.0
        %v1814 = vand.u32 %v774, 4294901760
        %1815 = vmatpush1.msra.mxu0 %v1814
        %1816 = vmatprep.subr.mxu0 0.0
        %v1817 = vand.u32 %v775, 4294901760
        %1818 = vmatpush1.msra.mxu0 %v1817
        %1819 = vmatprep.subr.mxu0 0.0
        %v1820 = vand.u32 %v776, 4294901760
        %1821 = vmatpush1.msra.mxu0 %v1820
        %1822 = vmatprep.subr.mxu0 0.0
        %v1823 = vand.u32 %v777, 4294901760
        %1824 = vmatpush1.msra.mxu0 %v1823
        %1825 = vmatprep.subr.mxu0 0.0
        %v1826 = vand.u32 %v778, 4294901760
        %1827 = vmatpush1.msra.mxu0 %v1826
        %v1828 = vand.u32 %v812, 4294901760
        %1829 = vmatprep.mubr.f32.mxu0 %v1828
        %v1830 = vand.u32 %v811, 4294901760
        %1831 = vmatmul.mubr.f32.gmra.mrb[0].mxu0 %v1830
        %v1832 = vpop.f32.mrb[0].mxu0
        %v1833 = vadd.f32 %v1708, %v1832
        %v1834 = vpop.f32.mrb[0].mxu0
        %v1835 = vand.u32 %v816, 4294901760
        %1836 = vmatprep.mubr.f32.mxu0 %v1835
        %v1837 = vand.u32 %v815, 4294901760
        %1838 = vmatmul.mubr.f32.gmra.mrb[0].mxu0 %v1837
        %v1839 = vpop.f32.mrb[0].mxu0
        %v1840 = vadd.f32 %v1715, %v1839
        %v1841 = vpop.f32.mrb[0].mxu0
        %v1842 = vand.u32 %v820, 4294901760
        %1843 = vmatprep.mubr.f32.mxu0 %v1842
        %v1844 = vand.u32 %v819, 4294901760
        %1845 = vmatmul.mubr.f32.gmra.mrb[0].mxu0 %v1844
        %v1846 = vpop.f32.mrb[0].mxu0
        %v1847 = vadd.f32 %v1722, %v1846
        %v1848 = vpop.f32.mrb[0].mxu0
        %v1849 = vand.u32 %v824, 4294901760
        %1850 = vmatprep.mubr.f32.mxu0 %v1849
        %v1851 = vand.u32 %v823, 4294901760
        %1852 = vmatmul.mubr.f32.gmra.mrb[0].mxu0 %v1851
        %v1853 = vpop.f32.mrb[0].mxu0
        %v1854 = vadd.f32 %v1729, %v1853
        %v1855 = vpop.f32.mrb[0].mxu0
        %1856 = vdwg.mxu0
        %1857 = vmatprep.subr.mxu0 0.0
        %v1858 = vand.u32 %v779, 4294901760
        %1859 = vmatpush1.msra.mxu0 %v1858
        %1860 = vmatprep.subr.mxu0 0.0
        %v1861 = vand.u32 %v780, 4294901760
        %1862 = vmatpush1.msra.mxu0 %v1861
        %1863 = vmatprep.subr.mxu0 0.0
        %v1864 = vand.u32 %v781, 4294901760
        %1865 = vmatpush1.msra.mxu0 %v1864
        %1866 = vmatprep.subr.mxu0 0.0
        %v1867 = vand.u32 %v782, 4294901760
        %1868 = vmatpush1.msra.mxu0 %v1867
        %1869 = vmatprep.subr.mxu0 0.0
        %v1870 = vand.u32 %v783, 4294901760
        %1871 = vmatpush1.msra.mxu0 %v1870
        %1872 = vmatprep.subr.mxu0 0.0
        %v1873 = vand.u32 %v784, 4294901760
        %1874 = vmatpush1.msra.mxu0 %v1873
        %1875 = vmatprep.subr.mxu0 0.0
        %v1876 = vand.u32 %v785, 4294901760
        %1877 = vmatpush1.msra.mxu0 %v1876
        %1878 = vmatprep.subr.mxu0 0.0
        %v1879 = vand.u32 %v786, 4294901760
        %1880 = vmatpush1.msra.mxu0 %v1879
        %1881 = vmatprep.subr.mxu0 0.0
        %v1882 = vand.u32 %v787, 4294901760
        %1883 = vmatpush1.msra.mxu0 %v1882
        %1884 = vmatprep.subr.mxu0 0.0
        %v1885 = vand.u32 %v788, 4294901760
        %1886 = vmatpush1.msra.mxu0 %v1885
        %1887 = vmatprep.subr.mxu0 0.0
        %v1888 = vand.u32 %v789, 4294901760
        %1889 = vmatpush1.msra.mxu0 %v1888
        %1890 = vmatprep.subr.mxu0 0.0
        %v1891 = vand.u32 %v790, 4294901760
        %1892 = vmatpush1.msra.mxu0 %v1891
        %1893 = vmatprep.subr.mxu0 0.0
        %v1894 = vand.u32 %v791, 4294901760
        %1895 = vmatpush1.msra.mxu0 %v1894
        %1896 = vmatprep.subr.mxu0 0.0
        %v1897 = vand.u32 %v792, 4294901760
        %1898 = vmatpush1.msra.mxu0 %v1897
        %1899 = vmatprep.subr.mxu0 0.0
        %v1900 = vand.u32 %v793, 4294901760
        %1901 = vmatpush1.msra.mxu0 %v1900
        %1902 = vmatprep.subr.mxu0 0.0
        %v1903 = vand.u32 %v794, 4294901760
        %1904 = vmatpush1.msra.mxu0 %v1903
        %1905 = vmatprep.subr.mxu0 0.0
        %v1906 = vand.u32 %v795, 4294901760
        %1907 = vmatpush1.msra.mxu0 %v1906
        %1908 = vmatprep.subr.mxu0 0.0
        %v1909 = vand.u32 %v796, 4294901760
        %1910 = vmatpush1.msra.mxu0 %v1909
        %1911 = vmatprep.subr.mxu0 0.0
        %v1912 = vand.u32 %v797, 4294901760
        %1913 = vmatpush1.msra.mxu0 %v1912
        %1914 = vmatprep.subr.mxu0 0.0
        %v1915 = vand.u32 %v798, 4294901760
        %1916 = vmatpush1.msra.mxu0 %v1915
        %1917 = vmatprep.subr.mxu0 0.0
        %v1918 = vand.u32 %v799, 4294901760
        %1919 = vmatpush1.msra.mxu0 %v1918
        %1920 = vmatprep.subr.mxu0 0.0
        %v1921 = vand.u32 %v800, 4294901760
        %1922 = vmatpush1.msra.mxu0 %v1921
        %1923 = vmatprep.subr.mxu0 0.0
        %v1924 = vand.u32 %v801, 4294901760
        %1925 = vmatpush1.msra.mxu0 %v1924
        %1926 = vmatprep.subr.mxu0 0.0
        %v1927 = vand.u32 %v802, 4294901760
        %1928 = vmatpush1.msra.mxu0 %v1927
        %1929 = vmatprep.subr.mxu0 0.0
        %v1930 = vand.u32 %v803, 4294901760
        %1931 = vmatpush1.msra.mxu0 %v1930
        %1932 = vmatprep.subr.mxu0 0.0
        %v1933 = vand.u32 %v804, 4294901760
        %1934 = vmatpush1.msra.mxu0 %v1933
        %1935 = vmatprep.subr.mxu0 0.0
        %v1936 = vand.u32 %v805, 4294901760
        %1937 = vmatpush1.msra.mxu0 %v1936
        %1938 = vmatprep.subr.mxu0 0.0
        %v1939 = vand.u32 %v806, 4294901760
        %1940 = vmatpush1.msra.mxu0 %v1939
        %1941 = vmatprep.subr.mxu0 0.0
        %v1942 = vand.u32 %v807, 4294901760
        %1943 = vmatpush1.msra.mxu0 %v1942
        %1944 = vmatprep.subr.mxu0 0.0
        %v1945 = vand.u32 %v808, 4294901760
        %1946 = vmatpush1.msra.mxu0 %v1945
        %1947 = vmatprep.subr.mxu0 0.0
        %v1948 = vand.u32 %v809, 4294901760
        %1949 = vmatpush1.msra.mxu0 %v1948
        %1950 = vmatprep.subr.mxu0 0.0
        %v1951 = vand.u32 %v810, 4294901760
        %1952 = vmatpush1.msra.mxu0 %v1951
        %v1953 = vand.u32 %v814, 4294901760
        %v1954 = vsub.f32 %v814, %v1953
        %v1955 = vand.u32 %v1954, 4294901760
        %v1956 = vsub.f32 %v1954, %v1955
        %v1957 = vand.u32 %v1956, 4294901760
        %1958 = vmatprep.mubr.f32.mxu0 %v1957
        %v1959 = vand.u32 %v813, 4294901760
        %v1960 = vsub.f32 %v813, %v1959
        %v1961 = vand.u32 %v1960, 4294901760
        %v1962 = vsub.f32 %v1960, %v1961
        %v1963 = vand.u32 %v1962, 4294901760
        %1964 = vmatmul.mubr.f32.gmra.mrb[0].mxu0 %v1963
        %v1965 = vpop.f32.mrb[0].mxu0
        %v1966 = vadd.f32 %v1833, %v1965
        %v1967 = vpop.f32.mrb[0].mxu0
        %v1968 = vand.u32 %v818, 4294901760
        %v1969 = vsub.f32 %v818, %v1968
        %v1970 = vand.u32 %v1969, 4294901760
        %v1971 = vsub.f32 %v1969, %v1970
        %v1972 = vand.u32 %v1971, 4294901760
        %1973 = vmatprep.mubr.f32.mxu0 %v1972
        %v1974 = vand.u32 %v817, 4294901760
        %v1975 = vsub.f32 %v817, %v1974
        %v1976 = vand.u32 %v1975, 4294901760
        %v1977 = vsub.f32 %v1975, %v1976
        %v1978 = vand.u32 %v1977, 4294901760
        %1979 = vmatmul.mubr.f32.gmra.mrb[0].mxu0 %v1978
        %v1980 = vpop.f32.mrb[0].mxu0
        %v1981 = vadd.f32 %v1840, %v1980
        %v1982 = vpop.f32.mrb[0].mxu0
        %v1983 = vand.u32 %v822, 4294901760
        %v1984 = vsub.f32 %v822, %v1983
        %v1985 = vand.u32 %v1984, 4294901760
        %v1986 = vsub.f32 %v1984, %v1985
        %v1987 = vand.u32 %v1986, 4294901760
        %1988 = vmatprep.mubr.f32.mxu0 %v1987
        %v1989 = vand.u32 %v821, 4294901760
        %v1990 = vsub.f32 %v821, %v1989
        %v1991 = vand.u32 %v1990, 4294901760
        %v1992 = vsub.f32 %v1990, %v1991
        %v1993 = vand.u32 %v1992, 4294901760
        %1994 = vmatmul.mubr.f32.gmra.mrb[0].mxu0 %v1993
        %v1995 = vpop.f32.mrb[0].mxu0
        %v1996 = vadd.f32 %v1847, %v1995
        %v1997 = vpop.f32.mrb[0].mxu0
        %v1998 = vand.u32 %v826, 4294901760
        %v1999 = vsub.f32 %v826, %v1998
        %v2000 = vand.u32 %v1999, 4294901760
        %v2001 = vsub.f32 %v1999, %v2000
        %v2002 = vand.u32 %v2001, 4294901760
        %2003 = vmatprep.mubr.f32.mxu0 %v2002
        %v2004 = vand.u32 %v825, 4294901760
        %v2005 = vsub.f32 %v825, %v2004
        %v2006 = vand.u32 %v2005, 4294901760
        %v2007 = vsub.f32 %v2005, %v2006
        %v2008 = vand.u32 %v2007, 4294901760
        %2009 = vmatmul.mubr.f32.gmra.mrb[0].mxu0 %v2008
        %v2010 = vpop.f32.mrb[0].mxu0
        %v2011 = vadd.f32 %v1854, %v2010
        %v2012 = vpop.f32.mrb[0].mxu0
        %2013 = vdwg.mxu0
        %2014 = vmatprep.subr.mxu0 0.0
        %v2015 = vand.u32 %v779, 4294901760
        %v2016 = vsub.f32 %v779, %v2015
        %v2017 = vand.u32 %v2016, 4294901760
        %v2018 = vsub.f32 %v2016, %v2017
        %v2019 = vand.u32 %v2018, 4294901760
        %2020 = vmatpush1.msra.mxu0 %v2019
        %2021 = vmatprep.subr.mxu0 0.0
        %v2022 = vand.u32 %v780, 4294901760
        %v2023 = vsub.f32 %v780, %v2022
        %v2024 = vand.u32 %v2023, 4294901760
        %v2025 = vsub.f32 %v2023, %v2024
        %v2026 = vand.u32 %v2025, 4294901760
        %2027 = vmatpush1.msra.mxu0 %v2026
        %2028 = vmatprep.subr.mxu0 0.0
        %v2029 = vand.u32 %v781, 4294901760
        %v2030 = vsub.f32 %v781, %v2029
        %v2031 = vand.u32 %v2030, 4294901760
        %v2032 = vsub.f32 %v2030, %v2031
        %v2033 = vand.u32 %v2032, 4294901760
        %2034 = vmatpush1.msra.mxu0 %v2033
        %2035 = vmatprep.subr.mxu0 0.0
        %v2036 = vand.u32 %v782, 4294901760
        %v2037 = vsub.f32 %v782, %v2036
        %v2038 = vand.u32 %v2037, 4294901760
        %v2039 = vsub.f32 %v2037, %v2038
        %v2040 = vand.u32 %v2039, 4294901760
        %2041 = vmatpush1.msra.mxu0 %v2040
        %2042 = vmatprep.subr.mxu0 0.0
        %v2043 = vand.u32 %v783, 4294901760
        %v2044 = vsub.f32 %v783, %v2043
        %v2045 = vand.u32 %v2044, 4294901760
        %v2046 = vsub.f32 %v2044, %v2045
        %v2047 = vand.u32 %v2046, 4294901760
        %2048 = vmatpush1.msra.mxu0 %v2047
        %2049 = vmatprep.subr.mxu0 0.0
        %v2050 = vand.u32 %v784, 4294901760
        %v2051 = vsub.f32 %v784, %v2050
        %v2052 = vand.u32 %v2051, 4294901760
        %v2053 = vsub.f32 %v2051, %v2052
        %v2054 = vand.u32 %v2053, 4294901760
        %2055 = vmatpush1.msra.mxu0 %v2054
        %2056 = vmatprep.subr.mxu0 0.0
        %v2057 = vand.u32 %v785, 4294901760
        %v2058 = vsub.f32 %v785, %v2057
        %v2059 = vand.u32 %v2058, 4294901760
        %v2060 = vsub.f32 %v2058, %v2059
        %v2061 = vand.u32 %v2060, 4294901760
        %2062 = vmatpush1.msra.mxu0 %v2061
        %2063 = vmatprep.subr.mxu0 0.0
        %v2064 = vand.u32 %v786, 4294901760
        %v2065 = vsub.f32 %v786, %v2064
        %v2066 = vand.u32 %v2065, 4294901760
        %v2067 = vsub.f32 %v2065, %v2066
        %v2068 = vand.u32 %v2067, 4294901760
        %2069 = vmatpush1.msra.mxu0 %v2068
        %2070 = vmatprep.subr.mxu0 0.0
        %v2071 = vand.u32 %v787, 4294901760
        %v2072 = vsub.f32 %v787, %v2071
        %v2073 = vand.u32 %v2072, 4294901760
        %v2074 = vsub.f32 %v2072, %v2073
        %v2075 = vand.u32 %v2074, 4294901760
        %2076 = vmatpush1.msra.mxu0 %v2075
        %2077 = vmatprep.subr.mxu0 0.0
        %v2078 = vand.u32 %v788, 4294901760
        %v2079 = vsub.f32 %v788, %v2078
        %v2080 = vand.u32 %v2079, 4294901760
        %v2081 = vsub.f32 %v2079, %v2080
        %v2082 = vand.u32 %v2081, 4294901760
        %2083 = vmatpush1.msra.mxu0 %v2082
        %2084 = vmatprep.subr.mxu0 0.0
        %v2085 = vand.u32 %v789, 4294901760
        %v2086 = vsub.f32 %v789, %v2085
        %v2087 = vand.u32 %v2086, 4294901760
        %v2088 = vsub.f32 %v2086, %v2087
        %v2089 = vand.u32 %v2088, 4294901760
        %2090 = vmatpush1.msra.mxu0 %v2089
        %2091 = vmatprep.subr.mxu0 0.0
        %v2092 = vand.u32 %v790, 4294901760
        %v2093 = vsub.f32 %v790, %v2092
        %v2094 = vand.u32 %v2093, 4294901760
        %v2095 = vsub.f32 %v2093, %v2094
        %v2096 = vand.u32 %v2095, 4294901760
        %2097 = vmatpush1.msra.mxu0 %v2096
        %2098 = vmatprep.subr.mxu0 0.0
        %v2099 = vand.u32 %v791, 4294901760
        %v2100 = vsub.f32 %v791, %v2099
        %v2101 = vand.u32 %v2100, 4294901760
        %v2102 = vsub.f32 %v2100, %v2101
        %v2103 = vand.u32 %v2102, 4294901760
        %2104 = vmatpush1.msra.mxu0 %v2103
        %2105 = vmatprep.subr.mxu0 0.0
        %v2106 = vand.u32 %v792, 4294901760
        %v2107 = vsub.f32 %v792, %v2106
        %v2108 = vand.u32 %v2107, 4294901760
        %v2109 = vsub.f32 %v2107, %v2108
        %v2110 = vand.u32 %v2109, 4294901760
        %2111 = vmatpush1.msra.mxu0 %v2110
        %2112 = vmatprep.subr.mxu0 0.0
        %v2113 = vand.u32 %v793, 4294901760
        %v2114 = vsub.f32 %v793, %v2113
        %v2115 = vand.u32 %v2114, 4294901760
        %v2116 = vsub.f32 %v2114, %v2115
        %v2117 = vand.u32 %v2116, 4294901760
        %2118 = vmatpush1.msra.mxu0 %v2117
        %2119 = vmatprep.subr.mxu0 0.0
        %v2120 = vand.u32 %v794, 4294901760
        %v2121 = vsub.f32 %v794, %v2120
        %v2122 = vand.u32 %v2121, 4294901760
        %v2123 = vsub.f32 %v2121, %v2122
        %v2124 = vand.u32 %v2123, 4294901760
        %2125 = vmatpush1.msra.mxu0 %v2124
        %2126 = vmatprep.subr.mxu0 0.0
        %v2127 = vand.u32 %v795, 4294901760
        %v2128 = vsub.f32 %v795, %v2127
        %v2129 = vand.u32 %v2128, 4294901760
        %v2130 = vsub.f32 %v2128, %v2129
        %v2131 = vand.u32 %v2130, 4294901760
        %2132 = vmatpush1.msra.mxu0 %v2131
        %2133 = vmatprep.subr.mxu0 0.0
        %v2134 = vand.u32 %v796, 4294901760
        %v2135 = vsub.f32 %v796, %v2134
        %v2136 = vand.u32 %v2135, 4294901760
        %v2137 = vsub.f32 %v2135, %v2136
        %v2138 = vand.u32 %v2137, 4294901760
        %2139 = vmatpush1.msra.mxu0 %v2138
        %2140 = vmatprep.subr.mxu0 0.0
        %v2141 = vand.u32 %v797, 4294901760
        %v2142 = vsub.f32 %v797, %v2141
        %v2143 = vand.u32 %v2142, 4294901760
        %v2144 = vsub.f32 %v2142, %v2143
        %v2145 = vand.u32 %v2144, 4294901760
        %2146 = vmatpush1.msra.mxu0 %v2145
        %2147 = vmatprep.subr.mxu0 0.0
        %v2148 = vand.u32 %v798, 4294901760
        %v2149 = vsub.f32 %v798, %v2148
        %v2150 = vand.u32 %v2149, 4294901760
        %v2151 = vsub.f32 %v2149, %v2150
        %v2152 = vand.u32 %v2151, 4294901760
        %2153 = vmatpush1.msra.mxu0 %v2152
        %2154 = vmatprep.subr.mxu0 0.0
        %v2155 = vand.u32 %v799, 4294901760
        %v2156 = vsub.f32 %v799, %v2155
        %v2157 = vand.u32 %v2156, 4294901760
        %v2158 = vsub.f32 %v2156, %v2157
        %v2159 = vand.u32 %v2158, 4294901760
        %2160 = vmatpush1.msra.mxu0 %v2159
        %2161 = vmatprep.subr.mxu0 0.0
        %v2162 = vand.u32 %v800, 4294901760
        %v2163 = vsub.f32 %v800, %v2162
        %v2164 = vand.u32 %v2163, 4294901760
        %v2165 = vsub.f32 %v2163, %v2164
        %v2166 = vand.u32 %v2165, 4294901760
        %2167 = vmatpush1.msra.mxu0 %v2166
        %2168 = vmatprep.subr.mxu0 0.0
        %v2169 = vand.u32 %v801, 4294901760
        %v2170 = vsub.f32 %v801, %v2169
        %v2171 = vand.u32 %v2170, 4294901760
        %v2172 = vsub.f32 %v2170, %v2171
        %v2173 = vand.u32 %v2172, 4294901760
        %2174 = vmatpush1.msra.mxu0 %v2173
        %2175 = vmatprep.subr.mxu0 0.0
        %v2176 = vand.u32 %v802, 4294901760
        %v2177 = vsub.f32 %v802, %v2176
        %v2178 = vand.u32 %v2177, 4294901760
        %v2179 = vsub.f32 %v2177, %v2178
        %v2180 = vand.u32 %v2179, 4294901760
        %2181 = vmatpush1.msra.mxu0 %v2180
        %2182 = vmatprep.subr.mxu0 0.0
        %v2183 = vand.u32 %v803, 4294901760
        %v2184 = vsub.f32 %v803, %v2183
        %v2185 = vand.u32 %v2184, 4294901760
        %v2186 = vsub.f32 %v2184, %v2185
        %v2187 = vand.u32 %v2186, 4294901760
        %2188 = vmatpush1.msra.mxu0 %v2187
        %2189 = vmatprep.subr.mxu0 0.0
        %v2190 = vand.u32 %v804, 4294901760
        %v2191 = vsub.f32 %v804, %v2190
        %v2192 = vand.u32 %v2191, 4294901760
        %v2193 = vsub.f32 %v2191, %v2192
        %v2194 = vand.u32 %v2193, 4294901760
        %2195 = vmatpush1.msra.mxu0 %v2194
        %2196 = vmatprep.subr.mxu0 0.0
        %v2197 = vand.u32 %v805, 4294901760
        %v2198 = vsub.f32 %v805, %v2197
        %v2199 = vand.u32 %v2198, 4294901760
        %v2200 = vsub.f32 %v2198, %v2199
        %v2201 = vand.u32 %v2200, 4294901760
        %2202 = vmatpush1.msra.mxu0 %v2201
        %2203 = vmatprep.subr.mxu0 0.0
        %v2204 = vand.u32 %v806, 4294901760
        %v2205 = vsub.f32 %v806, %v2204
        %v2206 = vand.u32 %v2205, 4294901760
        %v2207 = vsub.f32 %v2205, %v2206
        %v2208 = vand.u32 %v2207, 4294901760
        %2209 = vmatpush1.msra.mxu0 %v2208
        %2210 = vmatprep.subr.mxu0 0.0
        %v2211 = vand.u32 %v807, 4294901760
        %v2212 = vsub.f32 %v807, %v2211
        %v2213 = vand.u32 %v2212, 4294901760
        %v2214 = vsub.f32 %v2212, %v2213
        %v2215 = vand.u32 %v2214, 4294901760
        %2216 = vmatpush1.msra.mxu0 %v2215
        %2217 = vmatprep.subr.mxu0 0.0
        %v2218 = vand.u32 %v808, 4294901760
        %v2219 = vsub.f32 %v808, %v2218
        %v2220 = vand.u32 %v2219, 4294901760
        %v2221 = vsub.f32 %v2219, %v2220
        %v2222 = vand.u32 %v2221, 4294901760
        %2223 = vmatpush1.msra.mxu0 %v2222
        %2224 = vmatprep.subr.mxu0 0.0
        %v2225 = vand.u32 %v809, 4294901760
        %v2226 = vsub.f32 %v809, %v2225
        %v2227 = vand.u32 %v2226, 4294901760
        %v2228 = vsub.f32 %v2226, %v2227
        %v2229 = vand.u32 %v2228, 4294901760
        %2230 = vmatpush1.msra.mxu0 %v2229
        %2231 = vmatprep.subr.mxu0 0.0
        %v2232 = vand.u32 %v810, 4294901760
        %v2233 = vsub.f32 %v810, %v2232
        %v2234 = vand.u32 %v2233, 4294901760
        %v2235 = vsub.f32 %v2233, %v2234
        %v2236 = vand.u32 %v2235, 4294901760
        %2237 = vmatpush1.msra.mxu0 %v2236
        %v2238 = vand.u32 %v814, 4294901760
        %2239 = vmatprep.mubr.f32.mxu0 %v2238
        %v2240 = vand.u32 %v813, 4294901760
        %2241 = vmatmul.mubr.f32.gmra.mrb[0].mxu0 %v2240
        %v2242 = vpop.f32.mrb[0].mxu0
        %v2243 = vadd.f32 %v1966, %v2242
        %v2244 = vpop.f32.mrb[0].mxu0
        %v2245 = vand.u32 %v818, 4294901760
        %2246 = vmatprep.mubr.f32.mxu0 %v2245
        %v2247 = vand.u32 %v817, 4294901760
        %2248 = vmatmul.mubr.f32.gmra.mrb[0].mxu0 %v2247
        %v2249 = vpop.f32.mrb[0].mxu0
        %v2250 = vadd.f32 %v1981, %v2249
        %v2251 = vpop.f32.mrb[0].mxu0
        %v2252 = vand.u32 %v822, 4294901760
        %2253 = vmatprep.mubr.f32.mxu0 %v2252
        %v2254 = vand.u32 %v821, 4294901760
        %2255 = vmatmul.mubr.f32.gmra.mrb[0].mxu0 %v2254
        %v2256 = vpop.f32.mrb[0].mxu0
        %v2257 = vadd.f32 %v1996, %v2256
        %v2258 = vpop.f32.mrb[0].mxu0
        %v2259 = vand.u32 %v826, 4294901760
        %2260 = vmatprep.mubr.f32.mxu0 %v2259
        %v2261 = vand.u32 %v825, 4294901760
        %2262 = vmatmul.mubr.f32.gmra.mrb[0].mxu0 %v2261
        %v2263 = vpop.f32.mrb[0].mxu0
        %v2264 = vadd.f32 %v2011, %v2263
        %v2265 = vpop.f32.mrb[0].mxu0
        %2266 = vdwg.mxu0
        %2267 = vmatprep.subr.mxu0 0.0
        %v2268 = vand.u32 %v779, 4294901760
        %v2269 = vsub.f32 %v779, %v2268
        %2270 = vmatpush1.msra.mxu0 %v2269
        %2271 = vmatprep.subr.mxu0 0.0
        %v2272 = vand.u32 %v780, 4294901760
        %v2273 = vsub.f32 %v780, %v2272
        %2274 = vmatpush1.msra.mxu0 %v2273
        %2275 = vmatprep.subr.mxu0 0.0
        %v2276 = vand.u32 %v781, 4294901760
        %v2277 = vsub.f32 %v781, %v2276
        %2278 = vmatpush1.msra.mxu0 %v2277
        %2279 = vmatprep.subr.mxu0 0.0
        %v2280 = vand.u32 %v782, 4294901760
        %v2281 = vsub.f32 %v782, %v2280
        %2282 = vmatpush1.msra.mxu0 %v2281
        %2283 = vmatprep.subr.mxu0 0.0
        %v2284 = vand.u32 %v783, 4294901760
        %v2285 = vsub.f32 %v783, %v2284
        %2286 = vmatpush1.msra.mxu0 %v2285
        %2287 = vmatprep.subr.mxu0 0.0
        %v2288 = vand.u32 %v784, 4294901760
        %v2289 = vsub.f32 %v784, %v2288
        %2290 = vmatpush1.msra.mxu0 %v2289
        %2291 = vmatprep.subr.mxu0 0.0
        %v2292 = vand.u32 %v785, 4294901760
        %v2293 = vsub.f32 %v785, %v2292
        %2294 = vmatpush1.msra.mxu0 %v2293
        %2295 = vmatprep.subr.mxu0 0.0
        %v2296 = vand.u32 %v786, 4294901760
        %v2297 = vsub.f32 %v786, %v2296
        %2298 = vmatpush1.msra.mxu0 %v2297
        %2299 = vmatprep.subr.mxu0 0.0
        %v2300 = vand.u32 %v787, 4294901760
        %v2301 = vsub.f32 %v787, %v2300
        %2302 = vmatpush1.msra.mxu0 %v2301
        %2303 = vmatprep.subr.mxu0 0.0
        %v2304 = vand.u32 %v788, 4294901760
        %v2305 = vsub.f32 %v788, %v2304
        %2306 = vmatpush1.msra.mxu0 %v2305
        %2307 = vmatprep.subr.mxu0 0.0
        %v2308 = vand.u32 %v789, 4294901760
        %v2309 = vsub.f32 %v789, %v2308
        %2310 = vmatpush1.msra.mxu0 %v2309
        %2311 = vmatprep.subr.mxu0 0.0
        %v2312 = vand.u32 %v790, 4294901760
        %v2313 = vsub.f32 %v790, %v2312
        %2314 = vmatpush1.msra.mxu0 %v2313
        %2315 = vmatprep.subr.mxu0 0.0
        %v2316 = vand.u32 %v791, 4294901760
        %v2317 = vsub.f32 %v791, %v2316
        %2318 = vmatpush1.msra.mxu0 %v2317
        %2319 = vmatprep.subr.mxu0 0.0
        %v2320 = vand.u32 %v792, 4294901760
        %v2321 = vsub.f32 %v792, %v2320
        %2322 = vmatpush1.msra.mxu0 %v2321
        %2323 = vmatprep.subr.mxu0 0.0
        %v2324 = vand.u32 %v793, 4294901760
        %v2325 = vsub.f32 %v793, %v2324
        %2326 = vmatpush1.msra.mxu0 %v2325
        %2327 = vmatprep.subr.mxu0 0.0
        %v2328 = vand.u32 %v794, 4294901760
        %v2329 = vsub.f32 %v794, %v2328
        %2330 = vmatpush1.msra.mxu0 %v2329
        %2331 = vmatprep.subr.mxu0 0.0
        %v2332 = vand.u32 %v795, 4294901760
        %v2333 = vsub.f32 %v795, %v2332
        %2334 = vmatpush1.msra.mxu0 %v2333
        %2335 = vmatprep.subr.mxu0 0.0
        %v2336 = vand.u32 %v796, 4294901760
        %v2337 = vsub.f32 %v796, %v2336
        %2338 = vmatpush1.msra.mxu0 %v2337
        %2339 = vmatprep.subr.mxu0 0.0
        %v2340 = vand.u32 %v797, 4294901760
        %v2341 = vsub.f32 %v797, %v2340
        %2342 = vmatpush1.msra.mxu0 %v2341
        %2343 = vmatprep.subr.mxu0 0.0
        %v2344 = vand.u32 %v798, 4294901760
        %v2345 = vsub.f32 %v798, %v2344
        %2346 = vmatpush1.msra.mxu0 %v2345
        %2347 = vmatprep.subr.mxu0 0.0
        %v2348 = vand.u32 %v799, 4294901760
        %v2349 = vsub.f32 %v799, %v2348
        %2350 = vmatpush1.msra.mxu0 %v2349
        %2351 = vmatprep.subr.mxu0 0.0
        %v2352 = vand.u32 %v800, 4294901760
        %v2353 = vsub.f32 %v800, %v2352
        %2354 = vmatpush1.msra.mxu0 %v2353
        %2355 = vmatprep.subr.mxu0 0.0
        %v2356 = vand.u32 %v801, 4294901760
        %v2357 = vsub.f32 %v801, %v2356
        %2358 = vmatpush1.msra.mxu0 %v2357
        %2359 = vmatprep.subr.mxu0 0.0
        %v2360 = vand.u32 %v802, 4294901760
        %v2361 = vsub.f32 %v802, %v2360
        %2362 = vmatpush1.msra.mxu0 %v2361
        %2363 = vmatprep.subr.mxu0 0.0
        %v2364 = vand.u32 %v803, 4294901760
        %v2365 = vsub.f32 %v803, %v2364
        %2366 = vmatpush1.msra.mxu0 %v2365
        %2367 = vmatprep.subr.mxu0 0.0
        %v2368 = vand.u32 %v804, 4294901760
        %v2369 = vsub.f32 %v804, %v2368
        %2370 = vmatpush1.msra.mxu0 %v2369
        %2371 = vmatprep.subr.mxu0 0.0
        %v2372 = vand.u32 %v805, 4294901760
        %v2373 = vsub.f32 %v805, %v2372
        %2374 = vmatpush1.msra.mxu0 %v2373
        %2375 = vmatprep.subr.mxu0 0.0
        %v2376 = vand.u32 %v806, 4294901760
        %v2377 = vsub.f32 %v806, %v2376
        %2378 = vmatpush1.msra.mxu0 %v2377
        %2379 = vmatprep.subr.mxu0 0.0
        %v2380 = vand.u32 %v807, 4294901760
        %v2381 = vsub.f32 %v807, %v2380
        %2382 = vmatpush1.msra.mxu0 %v2381
        %2383 = vmatprep.subr.mxu0 0.0
        %v2384 = vand.u32 %v808, 4294901760
        %v2385 = vsub.f32 %v808, %v2384
        %2386 = vmatpush1.msra.mxu0 %v2385
        %2387 = vmatprep.subr.mxu0 0.0
        %v2388 = vand.u32 %v809, 4294901760
        %v2389 = vsub.f32 %v809, %v2388
        %2390 = vmatpush1.msra.mxu0 %v2389
        %2391 = vmatprep.subr.mxu0 0.0
        %v2392 = vand.u32 %v810, 4294901760
        %v2393 = vsub.f32 %v810, %v2392
        %2394 = vmatpush1.msra.mxu0 %v2393
        %v2395 = vand.u32 %v814, 4294901760
        %v2396 = vsub.f32 %v814, %v2395
        %2397 = vmatprep.mubr.f32.mxu0 %v2396
        %v2398 = vand.u32 %v813, 4294901760
        %v2399 = vsub.f32 %v813, %v2398
        %2400 = vmatmul.mubr.f32.gmra.mrb[0].mxu0 %v2399
        %v2401 = vpop.f32.mrb[0].mxu0
        %v2402 = vadd.f32 %v2243, %v2401
        %v2403 = vpop.f32.mrb[0].mxu0
        %v2404 = vand.u32 %v818, 4294901760
        %v2405 = vsub.f32 %v818, %v2404
        %2406 = vmatprep.mubr.f32.mxu0 %v2405
        %v2407 = vand.u32 %v817, 4294901760
        %v2408 = vsub.f32 %v817, %v2407
        %2409 = vmatmul.mubr.f32.gmra.mrb[0].mxu0 %v2408
        %v2410 = vpop.f32.mrb[0].mxu0
        %v2411 = vadd.f32 %v2250, %v2410
        %v2412 = vpop.f32.mrb[0].mxu0
        %v2413 = vand.u32 %v822, 4294901760
        %v2414 = vsub.f32 %v822, %v2413
        %2415 = vmatprep.mubr.f32.mxu0 %v2414
        %v2416 = vand.u32 %v821, 4294901760
        %v2417 = vsub.f32 %v821, %v2416
        %2418 = vmatmul.mubr.f32.gmra.mrb[0].mxu0 %v2417
        %v2419 = vpop.f32.mrb[0].mxu0
        %v2420 = vadd.f32 %v2257, %v2419
        %v2421 = vpop.f32.mrb[0].mxu0
        %v2422 = vand.u32 %v826, 4294901760
        %v2423 = vsub.f32 %v826, %v2422
        %2424 = vmatprep.mubr.f32.mxu0 %v2423
        %v2425 = vand.u32 %v825, 4294901760
        %v2426 = vsub.f32 %v825, %v2425
        %2427 = vmatmul.mubr.f32.gmra.mrb[0].mxu0 %v2426
        %v2428 = vpop.f32.mrb[0].mxu0
        %v2429 = vadd.f32 %v2264, %v2428
        %v2430 = vpop.f32.mrb[0].mxu0
        %2431 = vdwg.mxu0
        %2432 = vmatprep.subr.mxu0 0.0
        %v2433 = vand.u32 %v779, 4294901760
        %2434 = vmatpush1.msra.mxu0 %v2433
        %2435 = vmatprep.subr.mxu0 0.0
        %v2436 = vand.u32 %v780, 4294901760
        %2437 = vmatpush1.msra.mxu0 %v2436
        %2438 = vmatprep.subr.mxu0 0.0
        %v2439 = vand.u32 %v781, 4294901760
        %2440 = vmatpush1.msra.mxu0 %v2439
        %2441 = vmatprep.subr.mxu0 0.0
        %v2442 = vand.u32 %v782, 4294901760
        %2443 = vmatpush1.msra.mxu0 %v2442
        %2444 = vmatprep.subr.mxu0 0.0
        %v2445 = vand.u32 %v783, 4294901760
        %2446 = vmatpush1.msra.mxu0 %v2445
        %2447 = vmatprep.subr.mxu0 0.0
        %v2448 = vand.u32 %v784, 4294901760
        %2449 = vmatpush1.msra.mxu0 %v2448
        %2450 = vmatprep.subr.mxu0 0.0
        %v2451 = vand.u32 %v785, 4294901760
        %2452 = vmatpush1.msra.mxu0 %v2451
        %2453 = vmatprep.subr.mxu0 0.0
        %v2454 = vand.u32 %v786, 4294901760
        %2455 = vmatpush1.msra.mxu0 %v2454
        %2456 = vmatprep.subr.mxu0 0.0
        %v2457 = vand.u32 %v787, 4294901760
        %2458 = vmatpush1.msra.mxu0 %v2457
        %2459 = vmatprep.subr.mxu0 0.0
        %v2460 = vand.u32 %v788, 4294901760
        %2461 = vmatpush1.msra.mxu0 %v2460
        %2462 = vmatprep.subr.mxu0 0.0
        %v2463 = vand.u32 %v789, 4294901760
        %2464 = vmatpush1.msra.mxu0 %v2463
        %2465 = vmatprep.subr.mxu0 0.0
        %v2466 = vand.u32 %v790, 4294901760
        %2467 = vmatpush1.msra.mxu0 %v2466
        %2468 = vmatprep.subr.mxu0 0.0
        %v2469 = vand.u32 %v791, 4294901760
        %2470 = vmatpush1.msra.mxu0 %v2469
        %2471 = vmatprep.subr.mxu0 0.0
        %v2472 = vand.u32 %v792, 4294901760
        %2473 = vmatpush1.msra.mxu0 %v2472
        %2474 = vmatprep.subr.mxu0 0.0
        %v2475 = vand.u32 %v793, 4294901760
        %2476 = vmatpush1.msra.mxu0 %v2475
        %2477 = vmatprep.subr.mxu0 0.0
        %v2478 = vand.u32 %v794, 4294901760
        %2479 = vmatpush1.msra.mxu0 %v2478
        %2480 = vmatprep.subr.mxu0 0.0
        %v2481 = vand.u32 %v795, 4294901760
        %2482 = vmatpush1.msra.mxu0 %v2481
        %2483 = vmatprep.subr.mxu0 0.0
        %v2484 = vand.u32 %v796, 4294901760
        %2485 = vmatpush1.msra.mxu0 %v2484
        %2486 = vmatprep.subr.mxu0 0.0
        %v2487 = vand.u32 %v797, 4294901760
        %2488 = vmatpush1.msra.mxu0 %v2487
        %2489 = vmatprep.subr.mxu0 0.0
        %v2490 = vand.u32 %v798, 4294901760
        %2491 = vmatpush1.msra.mxu0 %v2490
        %2492 = vmatprep.subr.mxu0 0.0
        %v2493 = vand.u32 %v799, 4294901760
        %2494 = vmatpush1.msra.mxu0 %v2493
        %2495 = vmatprep.subr.mxu0 0.0
        %v2496 = vand.u32 %v800, 4294901760
        %2497 = vmatpush1.msra.mxu0 %v2496
        %2498 = vmatprep.subr.mxu0 0.0
        %v2499 = vand.u32 %v801, 4294901760
        %2500 = vmatpush1.msra.mxu0 %v2499
        %2501 = vmatprep.subr.mxu0 0.0
        %v2502 = vand.u32 %v802, 4294901760
        %2503 = vmatpush1.msra.mxu0 %v2502
        %2504 = vmatprep.subr.mxu0 0.0
        %v2505 = vand.u32 %v803, 4294901760
        %2506 = vmatpush1.msra.mxu0 %v2505
        %2507 = vmatprep.subr.mxu0 0.0
        %v2508 = vand.u32 %v804, 4294901760
        %2509 = vmatpush1.msra.mxu0 %v2508
        %2510 = vmatprep.subr.mxu0 0.0
        %v2511 = vand.u32 %v805, 4294901760
        %2512 = vmatpush1.msra.mxu0 %v2511
        %2513 = vmatprep.subr.mxu0 0.0
        %v2514 = vand.u32 %v806, 4294901760
        %2515 = vmatpush1.msra.mxu0 %v2514
        %2516 = vmatprep.subr.mxu0 0.0
        %v2517 = vand.u32 %v807, 4294901760
        %2518 = vmatpush1.msra.mxu0 %v2517
        %2519 = vmatprep.subr.mxu0 0.0
        %v2520 = vand.u32 %v808, 4294901760
        %2521 = vmatpush1.msra.mxu0 %v2520
        %2522 = vmatprep.subr.mxu0 0.0
        %v2523 = vand.u32 %v809, 4294901760
        %2524 = vmatpush1.msra.mxu0 %v2523
        %2525 = vmatprep.subr.mxu0 0.0
        %v2526 = vand.u32 %v810, 4294901760
        %2527 = vmatpush1.msra.mxu0 %v2526
        %v2528 = vand.u32 %v814, 4294901760
        %v2529 = vsub.f32 %v814, %v2528
        %v2530 = vand.u32 %v2529, 4294901760
        %2531 = vmatprep.mubr.f32.mxu0 %v2530
        %v2532 = vand.u32 %v813, 4294901760
        %v2533 = vsub.f32 %v813, %v2532
        %v2534 = vand.u32 %v2533, 4294901760
        %2535 = vmatmul.mubr.f32.gmra.mrb[0].mxu0 %v2534
        %v2536 = vpop.f32.mrb[0].mxu0
        %v2537 = vadd.f32 %v2402, %v2536
        %v2538 = vpop.f32.mrb[0].mxu0
        %v2539 = vand.u32 %v818, 4294901760
        %v2540 = vsub.f32 %v818, %v2539
        %v2541 = vand.u32 %v2540, 4294901760
        %2542 = vmatprep.mubr.f32.mxu0 %v2541
        %v2543 = vand.u32 %v817, 4294901760
        %v2544 = vsub.f32 %v817, %v2543
        %v2545 = vand.u32 %v2544, 4294901760
        %2546 = vmatmul.mubr.f32.gmra.mrb[0].mxu0 %v2545
        %v2547 = vpop.f32.mrb[0].mxu0
        %v2548 = vadd.f32 %v2411, %v2547
        %v2549 = vpop.f32.mrb[0].mxu0
        %v2550 = vand.u32 %v822, 4294901760
        %v2551 = vsub.f32 %v822, %v2550
        %v2552 = vand.u32 %v2551, 4294901760
        %2553 = vmatprep.mubr.f32.mxu0 %v2552
        %v2554 = vand.u32 %v821, 4294901760
        %v2555 = vsub.f32 %v821, %v2554
        %v2556 = vand.u32 %v2555, 4294901760
        %2557 = vmatmul.mubr.f32.gmra.mrb[0].mxu0 %v2556
        %v2558 = vpop.f32.mrb[0].mxu0
        %v2559 = vadd.f32 %v2420, %v2558
        %v2560 = vpop.f32.mrb[0].mxu0
        %v2561 = vand.u32 %v826, 4294901760
        %v2562 = vsub.f32 %v826, %v2561
        %v2563 = vand.u32 %v2562, 4294901760
        %2564 = vmatprep.mubr.f32.mxu0 %v2563
        %v2565 = vand.u32 %v825, 4294901760
        %v2566 = vsub.f32 %v825, %v2565
        %v2567 = vand.u32 %v2566, 4294901760
        %2568 = vmatmul.mubr.f32.gmra.mrb[0].mxu0 %v2567
        %v2569 = vpop.f32.mrb[0].mxu0
        %v2570 = vadd.f32 %v2429, %v2569
        %v2571 = vpop.f32.mrb[0].mxu0
        %2572 = vdwg.mxu0
        %2573 = vmatprep.subr.mxu0 0.0
        %v2574 = vand.u32 %v779, 4294901760
        %v2575 = vsub.f32 %v779, %v2574
        %v2576 = vand.u32 %v2575, 4294901760
        %2577 = vmatpush1.msra.mxu0 %v2576
        %2578 = vmatprep.subr.mxu0 0.0
        %v2579 = vand.u32 %v780, 4294901760
        %v2580 = vsub.f32 %v780, %v2579
        %v2581 = vand.u32 %v2580, 4294901760
        %2582 = vmatpush1.msra.mxu0 %v2581
        %2583 = vmatprep.subr.mxu0 0.0
        %v2584 = vand.u32 %v781, 4294901760
        %v2585 = vsub.f32 %v781, %v2584
        %v2586 = vand.u32 %v2585, 4294901760
        %2587 = vmatpush1.msra.mxu0 %v2586
        %2588 = vmatprep.subr.mxu0 0.0
        %v2589 = vand.u32 %v782, 4294901760
        %v2590 = vsub.f32 %v782, %v2589
        %v2591 = vand.u32 %v2590, 4294901760
        %2592 = vmatpush1.msra.mxu0 %v2591
        %2593 = vmatprep.subr.mxu0 0.0
        %v2594 = vand.u32 %v783, 4294901760
        %v2595 = vsub.f32 %v783, %v2594
        %v2596 = vand.u32 %v2595, 4294901760
        %2597 = vmatpush1.msra.mxu0 %v2596
        %2598 = vmatprep.subr.mxu0 0.0
        %v2599 = vand.u32 %v784, 4294901760
        %v2600 = vsub.f32 %v784, %v2599
        %v2601 = vand.u32 %v2600, 4294901760
        %2602 = vmatpush1.msra.mxu0 %v2601
        %2603 = vmatprep.subr.mxu0 0.0
        %v2604 = vand.u32 %v785, 4294901760
        %v2605 = vsub.f32 %v785, %v2604
        %v2606 = vand.u32 %v2605, 4294901760
        %2607 = vmatpush1.msra.mxu0 %v2606
        %2608 = vmatprep.subr.mxu0 0.0
        %v2609 = vand.u32 %v786, 4294901760
        %v2610 = vsub.f32 %v786, %v2609
        %v2611 = vand.u32 %v2610, 4294901760
        %2612 = vmatpush1.msra.mxu0 %v2611
        %2613 = vmatprep.subr.mxu0 0.0
        %v2614 = vand.u32 %v787, 4294901760
        %v2615 = vsub.f32 %v787, %v2614
        %v2616 = vand.u32 %v2615, 4294901760
        %2617 = vmatpush1.msra.mxu0 %v2616
        %2618 = vmatprep.subr.mxu0 0.0
        %v2619 = vand.u32 %v788, 4294901760
        %v2620 = vsub.f32 %v788, %v2619
        %v2621 = vand.u32 %v2620, 4294901760
        %2622 = vmatpush1.msra.mxu0 %v2621
        %2623 = vmatprep.subr.mxu0 0.0
        %v2624 = vand.u32 %v789, 4294901760
        %v2625 = vsub.f32 %v789, %v2624
        %v2626 = vand.u32 %v2625, 4294901760
        %2627 = vmatpush1.msra.mxu0 %v2626
        %2628 = vmatprep.subr.mxu0 0.0
        %v2629 = vand.u32 %v790, 4294901760
        %v2630 = vsub.f32 %v790, %v2629
        %v2631 = vand.u32 %v2630, 4294901760
        %2632 = vmatpush1.msra.mxu0 %v2631
        %2633 = vmatprep.subr.mxu0 0.0
        %v2634 = vand.u32 %v791, 4294901760
        %v2635 = vsub.f32 %v791, %v2634
        %v2636 = vand.u32 %v2635, 4294901760
        %2637 = vmatpush1.msra.mxu0 %v2636
        %2638 = vmatprep.subr.mxu0 0.0
        %v2639 = vand.u32 %v792, 4294901760
        %v2640 = vsub.f32 %v792, %v2639
        %v2641 = vand.u32 %v2640, 4294901760
        %2642 = vmatpush1.msra.mxu0 %v2641
        %2643 = vmatprep.subr.mxu0 0.0
        %v2644 = vand.u32 %v793, 4294901760
        %v2645 = vsub.f32 %v793, %v2644
        %v2646 = vand.u32 %v2645, 4294901760
        %2647 = vmatpush1.msra.mxu0 %v2646
        %2648 = vmatprep.subr.mxu0 0.0
        %v2649 = vand.u32 %v794, 4294901760
        %v2650 = vsub.f32 %v794, %v2649
        %v2651 = vand.u32 %v2650, 4294901760
        %2652 = vmatpush1.msra.mxu0 %v2651
        %2653 = vmatprep.subr.mxu0 0.0
        %v2654 = vand.u32 %v795, 4294901760
        %v2655 = vsub.f32 %v795, %v2654
        %v2656 = vand.u32 %v2655, 4294901760
        %2657 = vmatpush1.msra.mxu0 %v2656
        %2658 = vmatprep.subr.mxu0 0.0
        %v2659 = vand.u32 %v796, 4294901760
        %v2660 = vsub.f32 %v796, %v2659
        %v2661 = vand.u32 %v2660, 4294901760
        %2662 = vmatpush1.msra.mxu0 %v2661
        %2663 = vmatprep.subr.mxu0 0.0
        %v2664 = vand.u32 %v797, 4294901760
        %v2665 = vsub.f32 %v797, %v2664
        %v2666 = vand.u32 %v2665, 4294901760
        %2667 = vmatpush1.msra.mxu0 %v2666
        %2668 = vmatprep.subr.mxu0 0.0
        %v2669 = vand.u32 %v798, 4294901760
        %v2670 = vsub.f32 %v798, %v2669
        %v2671 = vand.u32 %v2670, 4294901760
        %2672 = vmatpush1.msra.mxu0 %v2671
        %2673 = vmatprep.subr.mxu0 0.0
        %v2674 = vand.u32 %v799, 4294901760
        %v2675 = vsub.f32 %v799, %v2674
        %v2676 = vand.u32 %v2675, 4294901760
        %2677 = vmatpush1.msra.mxu0 %v2676
        %2678 = vmatprep.subr.mxu0 0.0
        %v2679 = vand.u32 %v800, 4294901760
        %v2680 = vsub.f32 %v800, %v2679
        %v2681 = vand.u32 %v2680, 4294901760
        %2682 = vmatpush1.msra.mxu0 %v2681
        %2683 = vmatprep.subr.mxu0 0.0
        %v2684 = vand.u32 %v801, 4294901760
        %v2685 = vsub.f32 %v801, %v2684
        %v2686 = vand.u32 %v2685, 4294901760
        %2687 = vmatpush1.msra.mxu0 %v2686
        %2688 = vmatprep.subr.mxu0 0.0
        %v2689 = vand.u32 %v802, 4294901760
        %v2690 = vsub.f32 %v802, %v2689
        %v2691 = vand.u32 %v2690, 4294901760
        %2692 = vmatpush1.msra.mxu0 %v2691
        %2693 = vmatprep.subr.mxu0 0.0
        %v2694 = vand.u32 %v803, 4294901760
        %v2695 = vsub.f32 %v803, %v2694
        %v2696 = vand.u32 %v2695, 4294901760
        %2697 = vmatpush1.msra.mxu0 %v2696
        %2698 = vmatprep.subr.mxu0 0.0
        %v2699 = vand.u32 %v804, 4294901760
        %v2700 = vsub.f32 %v804, %v2699
        %v2701 = vand.u32 %v2700, 4294901760
        %2702 = vmatpush1.msra.mxu0 %v2701
        %2703 = vmatprep.subr.mxu0 0.0
        %v2704 = vand.u32 %v805, 4294901760
        %v2705 = vsub.f32 %v805, %v2704
        %v2706 = vand.u32 %v2705, 4294901760
        %2707 = vmatpush1.msra.mxu0 %v2706
        %2708 = vmatprep.subr.mxu0 0.0
        %v2709 = vand.u32 %v806, 4294901760
        %v2710 = vsub.f32 %v806, %v2709
        %v2711 = vand.u32 %v2710, 4294901760
        %2712 = vmatpush1.msra.mxu0 %v2711
        %2713 = vmatprep.subr.mxu0 0.0
        %v2714 = vand.u32 %v807, 4294901760
        %v2715 = vsub.f32 %v807, %v2714
        %v2716 = vand.u32 %v2715, 4294901760
        %2717 = vmatpush1.msra.mxu0 %v2716
        %2718 = vmatprep.subr.mxu0 0.0
        %v2719 = vand.u32 %v808, 4294901760
        %v2720 = vsub.f32 %v808, %v2719
        %v2721 = vand.u32 %v2720, 4294901760
        %2722 = vmatpush1.msra.mxu0 %v2721
        %2723 = vmatprep.subr.mxu0 0.0
        %v2724 = vand.u32 %v809, 4294901760
        %v2725 = vsub.f32 %v809, %v2724
        %v2726 = vand.u32 %v2725, 4294901760
        %2727 = vmatpush1.msra.mxu0 %v2726
        %2728 = vmatprep.subr.mxu0 0.0
        %v2729 = vand.u32 %v810, 4294901760
        %v2730 = vsub.f32 %v810, %v2729
        %v2731 = vand.u32 %v2730, 4294901760
        %2732 = vmatpush1.msra.mxu0 %v2731
        %v2733 = vand.u32 %v814, 4294901760
        %2734 = vmatprep.mubr.f32.mxu0 %v2733
        %v2735 = vand.u32 %v813, 4294901760
        %2736 = vmatmul.mubr.f32.gmra.mrb[0].mxu0 %v2735
        %v2737 = vpop.f32.mrb[0].mxu0
        %v2738 = vadd.f32 %v2537, %v2737
        %v2739 = vpop.f32.mrb[0].mxu0
        %v2740 = vand.u32 %v818, 4294901760
        %2741 = vmatprep.mubr.f32.mxu0 %v2740
        %v2742 = vand.u32 %v817, 4294901760
        %2743 = vmatmul.mubr.f32.gmra.mrb[0].mxu0 %v2742
        %v2744 = vpop.f32.mrb[0].mxu0
        %v2745 = vadd.f32 %v2548, %v2744
        %v2746 = vpop.f32.mrb[0].mxu0
        %v2747 = vand.u32 %v822, 4294901760
        %2748 = vmatprep.mubr.f32.mxu0 %v2747
        %v2749 = vand.u32 %v821, 4294901760
        %2750 = vmatmul.mubr.f32.gmra.mrb[0].mxu0 %v2749
        %v2751 = vpop.f32.mrb[0].mxu0
        %v2752 = vadd.f32 %v2559, %v2751
        %v2753 = vpop.f32.mrb[0].mxu0
        %v2754 = vand.u32 %v826, 4294901760
        %2755 = vmatprep.mubr.f32.mxu0 %v2754
        %v2756 = vand.u32 %v825, 4294901760
        %2757 = vmatmul.mubr.f32.gmra.mrb[0].mxu0 %v2756
        %v2758 = vpop.f32.mrb[0].mxu0
        %v2759 = vadd.f32 %v2570, %v2758
        %v2760 = vpop.f32.mrb[0].mxu0
        %2761 = vdwg.mxu0
        %2762 = vmatprep.subr.mxu0 0.0
        %v2763 = vand.u32 %v779, 4294901760
        %2764 = vmatpush1.msra.mxu0 %v2763
        %2765 = vmatprep.subr.mxu0 0.0
        %v2766 = vand.u32 %v780, 4294901760
        %2767 = vmatpush1.msra.mxu0 %v2766
        %2768 = vmatprep.subr.mxu0 0.0
        %v2769 = vand.u32 %v781, 4294901760
        %2770 = vmatpush1.msra.mxu0 %v2769
        %2771 = vmatprep.subr.mxu0 0.0
        %v2772 = vand.u32 %v782, 4294901760
        %2773 = vmatpush1.msra.mxu0 %v2772
        %2774 = vmatprep.subr.mxu0 0.0
        %v2775 = vand.u32 %v783, 4294901760
        %2776 = vmatpush1.msra.mxu0 %v2775
        %2777 = vmatprep.subr.mxu0 0.0
        %v2778 = vand.u32 %v784, 4294901760
        %2779 = vmatpush1.msra.mxu0 %v2778
        %2780 = vmatprep.subr.mxu0 0.0
        %v2781 = vand.u32 %v785, 4294901760
        %2782 = vmatpush1.msra.mxu0 %v2781
        %2783 = vmatprep.subr.mxu0 0.0
        %v2784 = vand.u32 %v786, 4294901760
        %2785 = vmatpush1.msra.mxu0 %v2784
        %2786 = vmatprep.subr.mxu0 0.0
        %v2787 = vand.u32 %v787, 4294901760
        %2788 = vmatpush1.msra.mxu0 %v2787
        %2789 = vmatprep.subr.mxu0 0.0
        %v2790 = vand.u32 %v788, 4294901760
        %2791 = vmatpush1.msra.mxu0 %v2790
        %2792 = vmatprep.subr.mxu0 0.0
        %v2793 = vand.u32 %v789, 4294901760
        %2794 = vmatpush1.msra.mxu0 %v2793
        %2795 = vmatprep.subr.mxu0 0.0
        %v2796 = vand.u32 %v790, 4294901760
        %2797 = vmatpush1.msra.mxu0 %v2796
        %2798 = vmatprep.subr.mxu0 0.0
        %v2799 = vand.u32 %v791, 4294901760
        %2800 = vmatpush1.msra.mxu0 %v2799
        %2801 = vmatprep.subr.mxu0 0.0
        %v2802 = vand.u32 %v792, 4294901760
        %2803 = vmatpush1.msra.mxu0 %v2802
        %2804 = vmatprep.subr.mxu0 0.0
        %v2805 = vand.u32 %v793, 4294901760
        %2806 = vmatpush1.msra.mxu0 %v2805
        %2807 = vmatprep.subr.mxu0 0.0
        %v2808 = vand.u32 %v794, 4294901760
        %2809 = vmatpush1.msra.mxu0 %v2808
        %2810 = vmatprep.subr.mxu0 0.0
        %v2811 = vand.u32 %v795, 4294901760
        %2812 = vmatpush1.msra.mxu0 %v2811
        %2813 = vmatprep.subr.mxu0 0.0
        %v2814 = vand.u32 %v796, 4294901760
        %2815 = vmatpush1.msra.mxu0 %v2814
        %2816 = vmatprep.subr.mxu0 0.0
        %v2817 = vand.u32 %v797, 4294901760
        %2818 = vmatpush1.msra.mxu0 %v2817
        %2819 = vmatprep.subr.mxu0 0.0
        %v2820 = vand.u32 %v798, 4294901760
        %2821 = vmatpush1.msra.mxu0 %v2820
        %2822 = vmatprep.subr.mxu0 0.0
        %v2823 = vand.u32 %v799, 4294901760
        %2824 = vmatpush1.msra.mxu0 %v2823
        %2825 = vmatprep.subr.mxu0 0.0
        %v2826 = vand.u32 %v800, 4294901760
        %2827 = vmatpush1.msra.mxu0 %v2826
        %2828 = vmatprep.subr.mxu0 0.0
        %v2829 = vand.u32 %v801, 4294901760
        %2830 = vmatpush1.msra.mxu0 %v2829
        %2831 = vmatprep.subr.mxu0 0.0
        %v2832 = vand.u32 %v802, 4294901760
        %2833 = vmatpush1.msra.mxu0 %v2832
        %2834 = vmatprep.subr.mxu0 0.0
        %v2835 = vand.u32 %v803, 4294901760
        %2836 = vmatpush1.msra.mxu0 %v2835
        %2837 = vmatprep.subr.mxu0 0.0
        %v2838 = vand.u32 %v804, 4294901760
        %2839 = vmatpush1.msra.mxu0 %v2838
        %2840 = vmatprep.subr.mxu0 0.0
        %v2841 = vand.u32 %v805, 4294901760
        %2842 = vmatpush1.msra.mxu0 %v2841
        %2843 = vmatprep.subr.mxu0 0.0
        %v2844 = vand.u32 %v806, 4294901760
        %2845 = vmatpush1.msra.mxu0 %v2844
        %2846 = vmatprep.subr.mxu0 0.0
        %v2847 = vand.u32 %v807, 4294901760
        %2848 = vmatpush1.msra.mxu0 %v2847
        %2849 = vmatprep.subr.mxu0 0.0
        %v2850 = vand.u32 %v808, 4294901760
        %2851 = vmatpush1.msra.mxu0 %v2850
        %2852 = vmatprep.subr.mxu0 0.0
        %v2853 = vand.u32 %v809, 4294901760
        %2854 = vmatpush1.msra.mxu0 %v2853
        %2855 = vmatprep.subr.mxu0 0.0
        %v2856 = vand.u32 %v810, 4294901760
        %2857 = vmatpush1.msra.mxu0 %v2856
        %v2858 = vand.u32 %v814, 4294901760
        %2859 = vmatprep.mubr.f32.mxu0 %v2858
        %v2860 = vand.u32 %v813, 4294901760
        %2861 = vmatmul.mubr.f32.gmra.mrb[0].mxu0 %v2860
        %v2862 = vpop.f32.mrb[0].mxu0
        %v2863 = vadd.f32 %v2738, %v2862
        %v2864 = vpop.f32.mrb[0].mxu0
        %v2865 = vand.u32 %v818, 4294901760
        %2866 = vmatprep.mubr.f32.mxu0 %v2865
        %v2867 = vand.u32 %v817, 4294901760
        %2868 = vmatmul.mubr.f32.gmra.mrb[0].mxu0 %v2867
        %v2869 = vpop.f32.mrb[0].mxu0
        %v2870 = vadd.f32 %v2745, %v2869
        %v2871 = vpop.f32.mrb[0].mxu0
        %v2872 = vand.u32 %v822, 4294901760
        %2873 = vmatprep.mubr.f32.mxu0 %v2872
        %v2874 = vand.u32 %v821, 4294901760
        %2875 = vmatmul.mubr.f32.gmra.mrb[0].mxu0 %v2874
        %v2876 = vpop.f32.mrb[0].mxu0
        %v2877 = vadd.f32 %v2752, %v2876
        %v2878 = vpop.f32.mrb[0].mxu0
        %v2879 = vand.u32 %v826, 4294901760
        %2880 = vmatprep.mubr.f32.mxu0 %v2879
        %v2881 = vand.u32 %v825, 4294901760
        %2882 = vmatmul.mubr.f32.gmra.mrb[0].mxu0 %v2881
        %v2883 = vpop.f32.mrb[0].mxu0
        %v2884 = vadd.f32 %v2759, %v2883
        %v2885 = vpop.f32.mrb[0].mxu0
        %2886 = vdwg.mxu0
        %2887 = vst [vmem:[%s170] sm:$0xff] %v2863
        %2888 = vst [vmem:[%s170 + $0x8] sm:$0xff] %v2870
        %2889 = vst [vmem:[%s170 + $0x10] sm:$0xff] %v2877
        %2890 = vst [vmem:[%s170 + $0x18] sm:$0xff] %v2884
        %s2891 = sand.u32 %s75, 1
        %s2892 = scalar_lea.sflag [#allocation4], %s2891
        %s2893 = sand.u32 %s75, 1
        %s2894 = smul.addr %s2893, 32
        %s2895 = scalar_lea.vmem [#allocation7], %s2894
        // Predicated region
        $region37: #{tpu_custom_call.1} parent=27 // pred_check
          %p2896 = pneg %p85
        $region38: #{tpu_custom_call.1} parent=27 // pred_check_branch
          %2898 = sbr.rel (%p2896) target = $region40
        $region39: #{tpu_custom_call.1} parent=27 // pred_region
          %s2900 = ssub.s32 512, 512
          %2901 = vsyncadd %s2892, %s2900
          %s2902 = smul.addr %s20, 128
          %s2903 = scalar_lea.hbm %s2, %s2902
          %s2904 = sshll.u32 %s2895, 4
          %s2905 = int_to_ptr.vmem [resolvable:$true] %s2904
          %2910 = dma.vmem_to_hbm [thread:$0]  %s2905, 512, %s2903, %s2892, 128, 256, 8
        $region40: #{tpu_custom_call.1} parent=27 // pred_fallthru
          _
      $region28: #{tpu_custom_call.1} parent=5 // pred_fallthru
        _
      %p2911 = scmp.le.s32.totalorder 2, %s15
      // Predicated region
      $region41: #{tpu_custom_call.1} parent=5 // pred_check
        %p2912 = pneg %p2911
      $region42: #{tpu_custom_call.1} parent=5 // pred_check_branch
        %2914 = sbr.rel (%p2912) target = $region44
      $region43: #{tpu_custom_call.1} parent=5 // pred_region
        %s2915 = ssub.s32 %s15, 2
        // Predicated region
        $region45: #{tpu_custom_call.1} parent=43 // pred_check
          %p2916 = pneg %p91
        $region46: #{tpu_custom_call.1} parent=43 // pred_check_branch
          %2918 = sbr.rel (%p2916) target = $region48
        $region47: #{tpu_custom_call.1} parent=43 // pred_region
          %s2919 = sand.u32 %s76, 1
          %s2920 = scalar_lea.sflag [#allocation4], %s2919
          %s2921 = sand.u32 %s76, 1
          %s2922 = smul.addr %s2921, 32
          %s2923 = scalar_lea.vmem [#allocation7], %s2922
          %2924 = dma.done %s2920, 512
        $region48: #{tpu_custom_call.1} parent=43 // pred_fallthru
          _
      $region44: #{tpu_custom_call.1} parent=5 // pred_fallthru
        _
    $region6: #{tpu_custom_call.1} parent=1 // loop_footer
      %s19 = sadd.s32 1, %s15
    $region7: #{tpu_custom_call.1} parent=1 // loop_footer_branch
      %14 = sbr.rel target = $region3
    $region8: #{tpu_custom_call.1} parent=1 // loop_exit
      _
    %2925 = vsyncpa [#allocation3], 1
    %s2926 = scalar_lea.sflag [#allocation3], 1
    %2927 = vsyncpa %s2926, 1
    %2928 = vsyncpa [#allocation6], 1
    %2929 = vsyncpa [#allocation4], 1
    %s2930 = scalar_lea.sflag [#allocation4], 1
    %2931 = vsyncpa %s2930, 1

</llo_original>
